<compile_context>
chip_gen: v7x
topology: tpu7x:2x2x1
jax: 0.10.0
libtpu: 0.0.40
codegen_flags: <defaults>
</compile_context>

<pallas_src>
import functools

import jax
import jax.numpy as jnp
import numpy as np
from jax.experimental import pallas as pl
from jax.experimental.pallas import tpu as pltpu


def _res_blocka_kernel(x_ref, mask_ref, bns_ref, bnb_ref, wc_ref, bc_ref,
                       w1_ref, b1_ref, wf1_ref, bf1_ref, wf2_ref, bf2_ref,
                       o_ref, xpad_ref, col_ref, *, dilation, width, pad, al):
    # Shapes (channels on sublanes, flattened spatial H*W on lanes):
    #   x_ref:    (Cin,  HW)        one image of the pre-BN input
    #   mask_ref: (9, 1, HW)        per-tap edge-validity masks (1.0 / 0.0)
    #   bns/bnb:  (Cin, 1)          folded BatchNorm scale / bias
    #   wc_ref:   (Cout, 9*Cin)     flattened block-diagonal grouped 3x3 weight
    #   bc_ref:   (Cout, 1)
    #   w1/b1:    (Cout, Cout)/(Cout, 1)     1x1 conv
    #   wf1/bf1:  (Cred, Cout)/(Cred, 1)     SE fc1
    #   wf2/bf2:  (Cout, Cred)/(Cout, 1)     SE fc2
    #   xpad_ref: (Cin, HW + 2*pad)  VMEM scratch, flat staging buffer w/ halo
    #   col_ref:  (9*Cin, HW)        VMEM scratch, im2col slab
    Cin, HW = x_ref.shape
    Cred = wf1_ref.shape[0]
    d = dilation
    W = width

    # BatchNorm2d (inference): per-channel affine.
    x1 = x_ref[...] * bns_ref[...] + bnb_ref[...]                     # (Cin, HW)

    # Stage into the flat padded scratch (lane-aligned store).  The halo is never
    # consumed unmasked, so it needs no zeroing.
    xpad_ref[:, pad:pad + HW] = x1

    # Pack the im2col slab: 9 shifted, edge-masked windows stacked along K.
    for kh in range(3):
        for kw in range(3):
            t = kh * 3 + kw
            off = (kh - 1) * d * W + (kw - 1) * d
            tap = xpad_ref[:, pad + off:pad + off + HW]               # (Cin, HW)
            m = mask_ref[t]                                           # (1, HW)
            col_ref[t * Cin:(t + 1) * Cin, :] = jnp.where(m != 0.0, tap, 0.0)

    # Grouped dilated 3x3 conv == ONE (Cout, 9*Cin) x (9*Cin, HW) GEMM.
    y = jnp.dot(wc_ref[...], col_ref[...],
                preferred_element_type=jnp.float32) + bc_ref[...]     # (Cout, HW)
    y = jnp.where(y > 0, y, 0.3 * y)                                  # LeakyReLU(0.3)

    # 1x1 conv.
    y = jnp.dot(w1_ref[...], y, preferred_element_type=jnp.float32) + b1_ref[...]
    y = jnp.where(y > 0, y, 0.3 * y)                                  # LeakyReLU(0.3)

    # SELayer.  fc1 folded through the (linear) global average pool:
    #   fc1(mean_HW(y)) == mean_HW(fc1_nobias(y)) + b_fc1
    z = jnp.dot(wf1_ref[...], y, preferred_element_type=jnp.float32)  # (Cred, HW)
    s = jnp.sum(z, axis=1, keepdims=True) * (1.0 / HW) + bf1_ref[...] # (Cred, 1)
    s = jnp.where(s > 0, s, 0.2 * s)                                  # LeakyReLU(0.2)
    g = bf2_ref[...]                                                  # (Cout, 1)
    for r in range(Cred):                                             # tiny K -> VPU
        g = g + wf2_ref[:, r:r + 1] * s[r:r + 1, :]
    g = jnp.tanh(g)                                                   # (Cout, 1)

    # Channel rescale, *al, residual with the pre-BN input (re-read from VMEM).
    o_ref[...] = (y * g * al + x_ref[...]).astype(o_ref.dtype)


def res_blocka_forward(x, gamma, beta, running_mean, running_var, eps,
                       w_conv, b_conv, w_1x1, b_1x1,
                       w_fc1, b_fc1, w_fc2, b_fc2,
                       *, dadis, groups, al=1.0):
    """x: (B, C, H, W) f32 (NCHW, like PyTorch).  Returns same shape/dtype."""
    B, C_in, H, W = x.shape
    C_out = w_conv.shape[0]
    assert C_in == C_out, "residual add requires in_ch == out_ch"
    cig = C_in // groups
    cog = C_out // groups
    C_red = w_fc1.shape[0]
    HW = H * W
    d = int(dadis)

    # Lane-aligned halo for the flat staging buffer (|tap offset| <= d*(W+1)).
    pad = ((d * W + d + 127) // 128) * 128

    # ---- parameter preprocessing (one-time layout plumbing, done in XLA) ----
    inv_std = jax.lax.rsqrt(running_var + eps)
    bn_scale = (gamma * inv_std).reshape(C_in, 1)
    bn_bias = (beta - running_mean * gamma * inv_std).reshape(C_in, 1)

    # Densify the grouped conv weight (OIHW, I = C_in//groups) into a
    # block-diagonal dense OIHW weight, then flatten to (C_out, 9*C_in) in
    # (tap, channel) K-order matching the im2col slab.
    w_dense = jnp.zeros((C_out, C_in, 3, 3), jnp.float32)
    for gi in range(groups):
        w_dense = w_dense.at[gi * cog:(gi + 1) * cog,
                             gi * cig:(gi + 1) * cig].set(w_conv[gi * cog:(gi + 1) * cog])
    w_flat = jnp.transpose(w_dense, (0, 2, 3, 1)).reshape(C_out, 9 * C_in)

    w_1x1_k = w_1x1[:, :, 0, 0]                     # (C_out, C_out), y_out = W @ y
    b_conv_c = b_conv.reshape(C_out, 1)
    b_1x1_c = b_1x1.reshape(C_out, 1)
    w_fc1_k = w_fc1                                 # (C_red, C_out)
    b_fc1_c = b_fc1.reshape(C_red, 1)
    w_fc2_k = w_fc2                                 # (C_out, C_red)
    b_fc2_c = b_fc2.reshape(C_out, 1)

    # Static per-tap edge-validity masks over the flattened spatial axis.
    hh, ww = np.meshgrid(np.arange(H), np.arange(W), indexing="ij")
    masks_np = np.zeros((9, 1, HW), np.float32)
    for kh in range(3):
        for kw in range(3):
            dh = (kh - 1) * d
            dw = (kw - 1) * d
            valid = ((hh + dh >= 0) & (hh + dh < H) &
                     (ww + dw >= 0) & (ww + dw < W))
            masks_np[kh * 3 + kw, 0] = valid.reshape(-1).astype(np.float32)
    masks = jnp.asarray(masks_np)

    # Pure reshape (no transpose): channels on sublanes, H*W on the lane axis.
    x_flat = x.reshape(B, C_in, HW)

    kernel = functools.partial(_res_blocka_kernel, dilation=d, width=W,
                               pad=pad, al=float(al))

    out_flat = pl.pallas_call(
        kernel,
        out_shape=jax.ShapeDtypeStruct((B, C_out, HW), x.dtype),
        grid_spec=pltpu.PrefetchScalarGridSpec(
            num_scalar_prefetch=0,
            grid=(B,),
            in_specs=[
                pl.BlockSpec((None, C_in, HW), lambda b: (b, 0, 0)),
                pl.BlockSpec((9, 1, HW), lambda b: (0, 0, 0)),
                pl.BlockSpec((C_in, 1), lambda b: (0, 0)),
                pl.BlockSpec((C_in, 1), lambda b: (0, 0)),
                pl.BlockSpec((C_out, 9 * C_in), lambda b: (0, 0)),
                pl.BlockSpec((C_out, 1), lambda b: (0, 0)),
                pl.BlockSpec((C_out, C_out), lambda b: (0, 0)),
                pl.BlockSpec((C_out, 1), lambda b: (0, 0)),
                pl.BlockSpec((C_red, C_out), lambda b: (0, 0)),
                pl.BlockSpec((C_red, 1), lambda b: (0, 0)),
                pl.BlockSpec((C_out, C_red), lambda b: (0, 0)),
                pl.BlockSpec((C_out, 1), lambda b: (0, 0)),
            ],
            out_specs=pl.BlockSpec((None, C_out, HW), lambda b: (b, 0, 0)),
            scratch_shapes=[
                pltpu.VMEM((C_in, HW + 2 * pad), jnp.float32),   # flat staging buf
                pltpu.VMEM((9 * C_in, HW), jnp.float32),         # im2col slab
            ],
        ),
        compiler_params=pltpu.CompilerParams(
            dimension_semantics=("parallel",),
        ),
    )(x_flat, masks, bn_scale, bn_bias, w_flat, b_conv_c, w_1x1_k, b_1x1_c,
      w_fc1_k, b_fc1_c, w_fc2_k, b_fc2_c)

    return out_flat.reshape(B, C_out, H, W)


def _reference(x, gamma, beta, rmean, rvar, eps,
               w_conv, b_conv, w_1x1, b_1x1, w_fc1, b_fc1, w_fc2, b_fc2,
               *, dadis, groups, al=1.0):
    inv = jax.lax.rsqrt(rvar + eps)
    x1 = ((x - rmean[None, :, None, None]) * (gamma * inv)[None, :, None, None]
          + beta[None, :, None, None])
    y = jax.lax.conv_general_dilated(
        x1, w_conv, window_strides=(1, 1),
        padding=[(dadis, dadis), (dadis, dadis)],
        rhs_dilation=(dadis, dadis),
        dimension_numbers=('NCHW', 'OIHW', 'NCHW'),
        feature_group_count=groups) + b_conv[None, :, None, None]
    y = jnp.where(y > 0, y, 0.3 * y)
    y = jax.lax.conv_general_dilated(
        y, w_1x1, window_strides=(1, 1), padding='VALID',
        dimension_numbers=('NCHW', 'OIHW', 'NCHW')) + b_1x1[None, :, None, None]
    y = jnp.where(y > 0, y, 0.3 * y)
    s = jnp.mean(y, axis=(2, 3))                        # (B, C)
    s = s @ w_fc1.T + b_fc1
    s = jnp.where(s > 0, s, 0.2 * s)
    s = jnp.tanh(s @ w_fc2.T + b_fc2)
    y = y * s[:, :, None, None]
    return y * al + x


if __name__ == "__main__":
    # Small shapes consistent with the module: x (B, C, H, W), in_ch == out_ch,
    # groups = out_ch // 8, SE reduction = 4, dadis (padding == dilation) = 2.
    B, C, H, W = 2, 16, 16, 16
    dadis = 2
    groups = C // 8
    C_red = C // 4
    eps = 1e-5

    key = jax.random.PRNGKey(0)
    keys = jax.random.split(key, 12)

    x = jax.random.normal(keys[0], (B, C, H, W), dtype=jnp.float32)

    # BatchNorm2d (inference) params.
    gamma = 1.0 + 0.1 * jax.random.normal(keys[1], (C,), dtype=jnp.float32)
    beta = 0.1 * jax.random.normal(keys[2], (C,), dtype=jnp.float32)
    rmean = 0.1 * jax.random.normal(keys[3], (C,), dtype=jnp.float32)
    rvar = jnp.abs(1.0 + 0.1 * jax.random.normal(keys[4], (C,), dtype=jnp.float32))

    # res_conv: grouped dilated 3x3 conv (PyTorch OIHW with I = C // groups).
    w_conv = 0.1 * jax.random.normal(keys[5], (C, C // groups, 3, 3), dtype=jnp.float32)
    b_conv = 0.05 * jax.random.normal(keys[6], (C,), dtype=jnp.float32)
    # res_cona: 1x1 conv.
    w_1x1 = 0.1 * jax.random.normal(keys[7], (C, C, 1, 1), dtype=jnp.float32)
    b_1x1 = 0.05 * jax.random.normal(keys[8], (C,), dtype=jnp.float32)
    # SELayer fc.
    w_fc1 = 0.2 * jax.random.normal(keys[9], (C_red, C), dtype=jnp.float32)
    b_fc1 = 0.05 * jax.random.normal(keys[10], (C_red,), dtype=jnp.float32)
    w_fc2 = 0.2 * jax.random.normal(keys[11], (C, C_red), dtype=jnp.float32)
    b_fc2 = jnp.zeros((C,), dtype=jnp.float32)

    out = res_blocka_forward(x, gamma, beta, rmean, rvar, eps,
                             w_conv, b_conv, w_1x1, b_1x1,
                             w_fc1, b_fc1, w_fc2, b_fc2,
                             dadis=dadis, groups=groups, al=1.0)
    out = jax.block_until_ready(out)

    ref = _reference(x, gamma, beta, rmean, rvar, eps,
                     w_conv, b_conv, w_1x1, b_1x1, w_fc1, b_fc1, w_fc2, b_fc2,
                     dadis=dadis, groups=groups, al=1.0)

    assert out.shape == x.shape and out.dtype == x.dtype
    assert jnp.allclose(out, ref, atol=5e-4, rtol=5e-4), "mismatch vs reference"

    print("KERNEL_OK")
</pallas_src>

<mosaic_0001>
module attributes {stable_mosaic.version = 11 : i64} {
  func.func @_res_blocka_kernel(%arg0: i32, %arg1: memref<1x16x256xf32, #tpu.memory_space<vmem>>, %arg2: memref<9x1x256xf32, #tpu.memory_space<vmem>>, %arg3: memref<16x1xf32, #tpu.memory_space<vmem>>, %arg4: memref<16x1xf32, #tpu.memory_space<vmem>>, %arg5: memref<16x144xf32, #tpu.memory_space<vmem>>, %arg6: memref<16x1xf32, #tpu.memory_space<vmem>>, %arg7: memref<16x16xf32, #tpu.memory_space<vmem>>, %arg8: memref<16x1xf32, #tpu.memory_space<vmem>>, %arg9: memref<4x16xf32, #tpu.memory_space<vmem>>, %arg10: memref<4x1xf32, #tpu.memory_space<vmem>>, %arg11: memref<16x4xf32, #tpu.memory_space<vmem>>, %arg12: memref<16x1xf32, #tpu.memory_space<vmem>>, %arg13: memref<1x16x256xf32, #tpu.memory_space<vmem>>, %arg14: memref<16x512xf32, #tpu.memory_space<vmem>>, %arg15: memref<144x256xf32, #tpu.memory_space<vmem>>) attributes {dimension_semantics = [#tpu.dimension_semantics<parallel>], iteration_bounds = array<i64: 2>, scalar_prefetch = 0 : i64, scratch_operands = 2 : i64, tpu.core_type = #tpu.core_type<tc>, window_params = [{transform_indices = @transform_0, window_bounds = array<i64: 1, 16, 256>}, {pipeline_mode = #tpu.pipeline_mode<synchronous>, transform_indices = @transform_1, window_bounds = array<i64: 9, 1, 256>}, {pipeline_mode = #tpu.pipeline_mode<synchronous>, transform_indices = @transform_2, window_bounds = array<i64: 16, 1>}, {pipeline_mode = #tpu.pipeline_mode<synchronous>, transform_indices = @transform_3, window_bounds = array<i64: 16, 1>}, {pipeline_mode = #tpu.pipeline_mode<synchronous>, transform_indices = @transform_4, window_bounds = array<i64: 16, 144>}, {pipeline_mode = #tpu.pipeline_mode<synchronous>, transform_indices = @transform_5, window_bounds = array<i64: 16, 1>}, {pipeline_mode = #tpu.pipeline_mode<synchronous>, transform_indices = @transform_6, window_bounds = array<i64: 16, 16>}, {pipeline_mode = #tpu.pipeline_mode<synchronous>, transform_indices = @transform_7, window_bounds = array<i64: 16, 1>}, {pipeline_mode = #tpu.pipeline_mode<synchronous>, transform_indices = @transform_8, window_bounds = array<i64: 4, 16>}, {pipeline_mode = #tpu.pipeline_mode<synchronous>, transform_indices = @transform_9, window_bounds = array<i64: 4, 1>}, {pipeline_mode = #tpu.pipeline_mode<synchronous>, transform_indices = @transform_10, window_bounds = array<i64: 16, 4>}, {pipeline_mode = #tpu.pipeline_mode<synchronous>, transform_indices = @transform_11, window_bounds = array<i64: 16, 1>}, {transform_indices = @transform_12, window_bounds = array<i64: 1, 16, 256>}]} {
    %c0 = arith.constant 0 : index
    %c0_0 = arith.constant 0 : index
    %c0_1 = arith.constant 0 : index
    %0 = vector.load %arg1[%c0, %c0_0, %c0_1] : memref<1x16x256xf32, #tpu.memory_space<vmem>>, vector<1x16x256xf32>
    %1 = vector.shape_cast %0 : vector<1x16x256xf32> to vector<16x256xf32>
    %c0_2 = arith.constant 0 : index
    %c0_3 = arith.constant 0 : index
    %2 = vector.load %arg3[%c0_2, %c0_3] : memref<16x1xf32, #tpu.memory_space<vmem>>, vector<16x1xf32>
    %3 = vector.broadcast %2 : vector<16x1xf32> to vector<16x256xf32>
    %4 = arith.mulf %1, %3 : vector<16x256xf32>
    %c0_4 = arith.constant 0 : index
    %c0_5 = arith.constant 0 : index
    %5 = vector.load %arg4[%c0_4, %c0_5] : memref<16x1xf32, #tpu.memory_space<vmem>>, vector<16x1xf32>
    %6 = vector.broadcast %5 : vector<16x1xf32> to vector<16x256xf32>
    %7 = arith.addf %4, %6 : vector<16x256xf32>
    %c0_6 = arith.constant 0 : index
    %c128 = arith.constant 128 : index
    %8 = vector.load %arg14[%c0_6, %c128] : memref<16x512xf32, #tpu.memory_space<vmem>>, vector<16x256xf32>
    tpu.vector_store %arg14[%c0_6, %c128], %7 {strides = array<i32>} : memref<16x512xf32, #tpu.memory_space<vmem>>, vector<16x256xf32>,
    %c0_7 = arith.constant 0 : index
    %c94 = arith.constant 94 : index
    %9 = vector.load %arg14[%c0_7, %c94] : memref<16x512xf32, #tpu.memory_space<vmem>>, vector<16x256xf32>
    %c0_8 = arith.constant 0 : index
    %c0_9 = arith.constant 0 : index
    %c0_10 = arith.constant 0 : index
    %10 = vector.load %arg2[%c0_8, %c0_9, %c0_10] : memref<9x1x256xf32, #tpu.memory_space<vmem>>, vector<1x1x256xf32>
    %11 = vector.shape_cast %10 : vector<1x1x256xf32> to vector<1x256xf32>
    %cst = arith.constant 0.000000e+00 : f32
    %12 = vector.broadcast %cst : f32 to vector<1x256xf32>
    %13 = arith.cmpf one, %11, %12 : vector<1x256xf32>
    %cst_11 = arith.constant 0.000000e+00 : f32
    %14 = vector.shape_cast %13 : vector<1x256xi1> to vector<1x256xi1>
    %15 = vector.broadcast %14 : vector<1x256xi1> to vector<16x256xi1>
    %16 = vector.broadcast %cst_11 : f32 to vector<16x256xf32>
    %17 = arith.select %15, %9, %16 : vector<16x256xi1>, vector<16x256xf32>
    %c0_12 = arith.constant 0 : index
    %c0_13 = arith.constant 0 : index
    %18 = vector.load %arg15[%c0_12, %c0_13] : memref<144x256xf32, #tpu.memory_space<vmem>>, vector<16x256xf32>
    tpu.vector_store %arg15[%c0_12, %c0_13], %17 {strides = array<i32>} : memref<144x256xf32, #tpu.memory_space<vmem>>, vector<16x256xf32>,
    %c0_14 = arith.constant 0 : index
    %c96 = arith.constant 96 : index
    %19 = vector.load %arg14[%c0_14, %c96] : memref<16x512xf32, #tpu.memory_space<vmem>>, vector<16x256xf32>
    %c1 = arith.constant 1 : index
    %c0_15 = arith.constant 0 : index
    %c0_16 = arith.constant 0 : index
    %20 = vector.load %arg2[%c1, %c0_15, %c0_16] : memref<9x1x256xf32, #tpu.memory_space<vmem>>, vector<1x1x256xf32>
    %21 = vector.shape_cast %20 : vector<1x1x256xf32> to vector<1x256xf32>
    %cst_17 = arith.constant 0.000000e+00 : f32
    %22 = vector.broadcast %cst_17 : f32 to vector<1x256xf32>
    %23 = arith.cmpf one, %21, %22 : vector<1x256xf32>
    %cst_18 = arith.constant 0.000000e+00 : f32
    %24 = vector.shape_cast %23 : vector<1x256xi1> to vector<1x256xi1>
    %25 = vector.broadcast %24 : vector<1x256xi1> to vector<16x256xi1>
    %26 = vector.broadcast %cst_18 : f32 to vector<16x256xf32>
    %27 = arith.select %25, %19, %26 : vector<16x256xi1>, vector<16x256xf32>
    %c16 = arith.constant 16 : index
    %c0_19 = arith.constant 0 : index
    %28 = vector.load %arg15[%c16, %c0_19] : memref<144x256xf32, #tpu.memory_space<vmem>>, vector<16x256xf32>
    tpu.vector_store %arg15[%c16, %c0_19], %27 {strides = array<i32>} : memref<144x256xf32, #tpu.memory_space<vmem>>, vector<16x256xf32>,
    %c0_20 = arith.constant 0 : index
    %c98 = arith.constant 98 : index
    %29 = vector.load %arg14[%c0_20, %c98] : memref<16x512xf32, #tpu.memory_space<vmem>>, vector<16x256xf32>
    %c2 = arith.constant 2 : index
    %c0_21 = arith.constant 0 : index
    %c0_22 = arith.constant 0 : index
    %30 = vector.load %arg2[%c2, %c0_21, %c0_22] : memref<9x1x256xf32, #tpu.memory_space<vmem>>, vector<1x1x256xf32>
    %31 = vector.shape_cast %30 : vector<1x1x256xf32> to vector<1x256xf32>
    %cst_23 = arith.constant 0.000000e+00 : f32
    %32 = vector.broadcast %cst_23 : f32 to vector<1x256xf32>
    %33 = arith.cmpf one, %31, %32 : vector<1x256xf32>
    %cst_24 = arith.constant 0.000000e+00 : f32
    %34 = vector.shape_cast %33 : vector<1x256xi1> to vector<1x256xi1>
    %35 = vector.broadcast %34 : vector<1x256xi1> to vector<16x256xi1>
    %36 = vector.broadcast %cst_24 : f32 to vector<16x256xf32>
    %37 = arith.select %35, %29, %36 : vector<16x256xi1>, vector<16x256xf32>
    %c32 = arith.constant 32 : index
    %c0_25 = arith.constant 0 : index
    %38 = vector.load %arg15[%c32, %c0_25] : memref<144x256xf32, #tpu.memory_space<vmem>>, vector<16x256xf32>
    tpu.vector_store %arg15[%c32, %c0_25], %37 {strides = array<i32>} : memref<144x256xf32, #tpu.memory_space<vmem>>, vector<16x256xf32>,
    %c0_26 = arith.constant 0 : index
    %c126 = arith.constant 126 : index
    %39 = vector.load %arg14[%c0_26, %c126] : memref<16x512xf32, #tpu.memory_space<vmem>>, vector<16x256xf32>
    %c3 = arith.constant 3 : index
    %c0_27 = arith.constant 0 : index
    %c0_28 = arith.constant 0 : index
    %40 = vector.load %arg2[%c3, %c0_27, %c0_28] : memref<9x1x256xf32, #tpu.memory_space<vmem>>, vector<1x1x256xf32>
    %41 = vector.shape_cast %40 : vector<1x1x256xf32> to vector<1x256xf32>
    %cst_29 = arith.constant 0.000000e+00 : f32
    %42 = vector.broadcast %cst_29 : f32 to vector<1x256xf32>
    %43 = arith.cmpf one, %41, %42 : vector<1x256xf32>
    %cst_30 = arith.constant 0.000000e+00 : f32
    %44 = vector.shape_cast %43 : vector<1x256xi1> to vector<1x256xi1>
    %45 = vector.broadcast %44 : vector<1x256xi1> to vector<16x256xi1>
    %46 = vector.broadcast %cst_30 : f32 to vector<16x256xf32>
    %47 = arith.select %45, %39, %46 : vector<16x256xi1>, vector<16x256xf32>
    %c48 = arith.constant 48 : index
    %c0_31 = arith.constant 0 : index
    %48 = vector.load %arg15[%c48, %c0_31] : memref<144x256xf32, #tpu.memory_space<vmem>>, vector<16x256xf32>
    tpu.vector_store %arg15[%c48, %c0_31], %47 {strides = array<i32>} : memref<144x256xf32, #tpu.memory_space<vmem>>, vector<16x256xf32>,
    %c0_32 = arith.constant 0 : index
    %c128_33 = arith.constant 128 : index
    %49 = vector.load %arg14[%c0_32, %c128_33] : memref<16x512xf32, #tpu.memory_space<vmem>>, vector<16x256xf32>
    %c4 = arith.constant 4 : index
    %c0_34 = arith.constant 0 : index
    %c0_35 = arith.constant 0 : index
    %50 = vector.load %arg2[%c4, %c0_34, %c0_35] : memref<9x1x256xf32, #tpu.memory_space<vmem>>, vector<1x1x256xf32>
    %51 = vector.shape_cast %50 : vector<1x1x256xf32> to vector<1x256xf32>
    %cst_36 = arith.constant 0.000000e+00 : f32
    %52 = vector.broadcast %cst_36 : f32 to vector<1x256xf32>
    %53 = arith.cmpf one, %51, %52 : vector<1x256xf32>
    %cst_37 = arith.constant 0.000000e+00 : f32
    %54 = vector.shape_cast %53 : vector<1x256xi1> to vector<1x256xi1>
    %55 = vector.broadcast %54 : vector<1x256xi1> to vector<16x256xi1>
    %56 = vector.broadcast %cst_37 : f32 to vector<16x256xf32>
    %57 = arith.select %55, %49, %56 : vector<16x256xi1>, vector<16x256xf32>
    %c64 = arith.constant 64 : index
    %c0_38 = arith.constant 0 : index
    %58 = vector.load %arg15[%c64, %c0_38] : memref<144x256xf32, #tpu.memory_space<vmem>>, vector<16x256xf32>
    tpu.vector_store %arg15[%c64, %c0_38], %57 {strides = array<i32>} : memref<144x256xf32, #tpu.memory_space<vmem>>, vector<16x256xf32>,
    %c0_39 = arith.constant 0 : index
    %c130 = arith.constant 130 : index
    %59 = vector.load %arg14[%c0_39, %c130] : memref<16x512xf32, #tpu.memory_space<vmem>>, vector<16x256xf32>
    %c5 = arith.constant 5 : index
    %c0_40 = arith.constant 0 : index
    %c0_41 = arith.constant 0 : index
    %60 = vector.load %arg2[%c5, %c0_40, %c0_41] : memref<9x1x256xf32, #tpu.memory_space<vmem>>, vector<1x1x256xf32>
    %61 = vector.shape_cast %60 : vector<1x1x256xf32> to vector<1x256xf32>
    %cst_42 = arith.constant 0.000000e+00 : f32
    %62 = vector.broadcast %cst_42 : f32 to vector<1x256xf32>
    %63 = arith.cmpf one, %61, %62 : vector<1x256xf32>
    %cst_43 = arith.constant 0.000000e+00 : f32
    %64 = vector.shape_cast %63 : vector<1x256xi1> to vector<1x256xi1>
    %65 = vector.broadcast %64 : vector<1x256xi1> to vector<16x256xi1>
    %66 = vector.broadcast %cst_43 : f32 to vector<16x256xf32>
    %67 = arith.select %65, %59, %66 : vector<16x256xi1>, vector<16x256xf32>
    %c80 = arith.constant 80 : index
    %c0_44 = arith.constant 0 : index
    %68 = vector.load %arg15[%c80, %c0_44] : memref<144x256xf32, #tpu.memory_space<vmem>>, vector<16x256xf32>
    tpu.vector_store %arg15[%c80, %c0_44], %67 {strides = array<i32>} : memref<144x256xf32, #tpu.memory_space<vmem>>, vector<16x256xf32>,
    %c0_45 = arith.constant 0 : index
    %c158 = arith.constant 158 : index
    %69 = vector.load %arg14[%c0_45, %c158] : memref<16x512xf32, #tpu.memory_space<vmem>>, vector<16x256xf32>
    %c6 = arith.constant 6 : index
    %c0_46 = arith.constant 0 : index
    %c0_47 = arith.constant 0 : index
    %70 = vector.load %arg2[%c6, %c0_46, %c0_47] : memref<9x1x256xf32, #tpu.memory_space<vmem>>, vector<1x1x256xf32>
    %71 = vector.shape_cast %70 : vector<1x1x256xf32> to vector<1x256xf32>
    %cst_48 = arith.constant 0.000000e+00 : f32
    %72 = vector.broadcast %cst_48 : f32 to vector<1x256xf32>
    %73 = arith.cmpf one, %71, %72 : vector<1x256xf32>
    %cst_49 = arith.constant 0.000000e+00 : f32
    %74 = vector.shape_cast %73 : vector<1x256xi1> to vector<1x256xi1>
    %75 = vector.broadcast %74 : vector<1x256xi1> to vector<16x256xi1>
    %76 = vector.broadcast %cst_49 : f32 to vector<16x256xf32>
    %77 = arith.select %75, %69, %76 : vector<16x256xi1>, vector<16x256xf32>
    %c96_50 = arith.constant 96 : index
    %c0_51 = arith.constant 0 : index
    %78 = vector.load %arg15[%c96_50, %c0_51] : memref<144x256xf32, #tpu.memory_space<vmem>>, vector<16x256xf32>
    tpu.vector_store %arg15[%c96_50, %c0_51], %77 {strides = array<i32>} : memref<144x256xf32, #tpu.memory_space<vmem>>, vector<16x256xf32>,
    %c0_52 = arith.constant 0 : index
    %c160 = arith.constant 160 : index
    %79 = vector.load %arg14[%c0_52, %c160] : memref<16x512xf32, #tpu.memory_space<vmem>>, vector<16x256xf32>
    %c7 = arith.constant 7 : index
    %c0_53 = arith.constant 0 : index
    %c0_54 = arith.constant 0 : index
    %80 = vector.load %arg2[%c7, %c0_53, %c0_54] : memref<9x1x256xf32, #tpu.memory_space<vmem>>, vector<1x1x256xf32>
    %81 = vector.shape_cast %80 : vector<1x1x256xf32> to vector<1x256xf32>
    %cst_55 = arith.constant 0.000000e+00 : f32
    %82 = vector.broadcast %cst_55 : f32 to vector<1x256xf32>
    %83 = arith.cmpf one, %81, %82 : vector<1x256xf32>
    %cst_56 = arith.constant 0.000000e+00 : f32
    %84 = vector.shape_cast %83 : vector<1x256xi1> to vector<1x256xi1>
    %85 = vector.broadcast %84 : vector<1x256xi1> to vector<16x256xi1>
    %86 = vector.broadcast %cst_56 : f32 to vector<16x256xf32>
    %87 = arith.select %85, %79, %86 : vector<16x256xi1>, vector<16x256xf32>
    %c112 = arith.constant 112 : index
    %c0_57 = arith.constant 0 : index
    %88 = vector.load %arg15[%c112, %c0_57] : memref<144x256xf32, #tpu.memory_space<vmem>>, vector<16x256xf32>
    tpu.vector_store %arg15[%c112, %c0_57], %87 {strides = array<i32>} : memref<144x256xf32, #tpu.memory_space<vmem>>, vector<16x256xf32>,
    %c0_58 = arith.constant 0 : index
    %c162 = arith.constant 162 : index
    %89 = vector.load %arg14[%c0_58, %c162] : memref<16x512xf32, #tpu.memory_space<vmem>>, vector<16x256xf32>
    %c8 = arith.constant 8 : index
    %c0_59 = arith.constant 0 : index
    %c0_60 = arith.constant 0 : index
    %90 = vector.load %arg2[%c8, %c0_59, %c0_60] : memref<9x1x256xf32, #tpu.memory_space<vmem>>, vector<1x1x256xf32>
    %91 = vector.shape_cast %90 : vector<1x1x256xf32> to vector<1x256xf32>
    %cst_61 = arith.constant 0.000000e+00 : f32
    %92 = vector.broadcast %cst_61 : f32 to vector<1x256xf32>
    %93 = arith.cmpf one, %91, %92 : vector<1x256xf32>
    %cst_62 = arith.constant 0.000000e+00 : f32
    %94 = vector.shape_cast %93 : vector<1x256xi1> to vector<1x256xi1>
    %95 = vector.broadcast %94 : vector<1x256xi1> to vector<16x256xi1>
    %96 = vector.broadcast %cst_62 : f32 to vector<16x256xf32>
    %97 = arith.select %95, %89, %96 : vector<16x256xi1>, vector<16x256xf32>
    %c128_63 = arith.constant 128 : index
    %c0_64 = arith.constant 0 : index
    %98 = vector.load %arg15[%c128_63, %c0_64] : memref<144x256xf32, #tpu.memory_space<vmem>>, vector<16x256xf32>
    tpu.vector_store %arg15[%c128_63, %c0_64], %97 {strides = array<i32>} : memref<144x256xf32, #tpu.memory_space<vmem>>, vector<16x256xf32>,
    %c0_65 = arith.constant 0 : index
    %c0_66 = arith.constant 0 : index
    %99 = vector.load %arg5[%c0_65, %c0_66] : memref<16x144xf32, #tpu.memory_space<vmem>>, vector<16x144xf32>
    %c0_67 = arith.constant 0 : index
    %c0_68 = arith.constant 0 : index
    %100 = vector.load %arg15[%c0_67, %c0_68] : memref<144x256xf32, #tpu.memory_space<vmem>>, vector<144x256xf32>
    %cst_69 = arith.constant dense<0.000000e+00> : vector<16x256xf32>
    %101 = tpu.matmul %99, %100, %cst_69 {dimension_numbers = #tpu.dot_dimension_numbers<[1], [0], [0], [1], [0, 0, 1, 1], [], []>} : vector<16x144xf32>, vector<144x256xf32>, vector<16x256xf32> -> vector<16x256xf32>
    %c0_70 = arith.constant 0 : index
    %c0_71 = arith.constant 0 : index
    %102 = vector.load %arg6[%c0_70, %c0_71] : memref<16x1xf32, #tpu.memory_space<vmem>>, vector<16x1xf32>
    %103 = vector.broadcast %102 : vector<16x1xf32> to vector<16x256xf32>
    %104 = arith.addf %101, %103 : vector<16x256xf32>
    %cst_72 = arith.constant 0.000000e+00 : f32
    %105 = vector.broadcast %cst_72 : f32 to vector<16x256xf32>
    %106 = arith.cmpf ogt, %104, %105 : vector<16x256xf32>
    %cst_73 = arith.constant 3.000000e-01 : f32
    %107 = vector.broadcast %cst_73 : f32 to vector<16x256xf32>
    %108 = arith.mulf %107, %104 : vector<16x256xf32>
    %109 = arith.select %106, %104, %108 : vector<16x256xi1>, vector<16x256xf32>
    %c0_74 = arith.constant 0 : index
    %c0_75 = arith.constant 0 : index
    %110 = vector.load %arg7[%c0_74, %c0_75] : memref<16x16xf32, #tpu.memory_space<vmem>>, vector<16x16xf32>
    %cst_76 = arith.constant dense<0.000000e+00> : vector<16x256xf32>
    %111 = tpu.matmul %110, %109, %cst_76 {dimension_numbers = #tpu.dot_dimension_numbers<[1], [0], [0], [1], [0, 0, 1, 1], [], []>} : vector<16x16xf32>, vector<16x256xf32>, vector<16x256xf32> -> vector<16x256xf32>
    %c0_77 = arith.constant 0 : index
    %c0_78 = arith.constant 0 : index
    %112 = vector.load %arg8[%c0_77, %c0_78] : memref<16x1xf32, #tpu.memory_space<vmem>>, vector<16x1xf32>
    %113 = vector.broadcast %112 : vector<16x1xf32> to vector<16x256xf32>
    %114 = arith.addf %111, %113 : vector<16x256xf32>
    %cst_79 = arith.constant 0.000000e+00 : f32
    %115 = vector.broadcast %cst_79 : f32 to vector<16x256xf32>
    %116 = arith.cmpf ogt, %114, %115 : vector<16x256xf32>
    %cst_80 = arith.constant 3.000000e-01 : f32
    %117 = vector.broadcast %cst_80 : f32 to vector<16x256xf32>
    %118 = arith.mulf %117, %114 : vector<16x256xf32>
    %119 = arith.select %116, %114, %118 : vector<16x256xi1>, vector<16x256xf32>
    %c0_81 = arith.constant 0 : index
    %c0_82 = arith.constant 0 : index
    %120 = vector.load %arg9[%c0_81, %c0_82] : memref<4x16xf32, #tpu.memory_space<vmem>>, vector<4x16xf32>
    %cst_83 = arith.constant dense<0.000000e+00> : vector<4x256xf32>
    %121 = tpu.matmul %120, %119, %cst_83 {dimension_numbers = #tpu.dot_dimension_numbers<[1], [0], [0], [1], [0, 0, 1, 1], [], []>} : vector<4x16xf32>, vector<16x256xf32>, vector<4x256xf32> -> vector<4x256xf32>
    %cst_84 = arith.constant dense<0.000000e+00> : vector<4xf32>
    %122 = vector.multi_reduction <add>, %121, %cst_84 [1] : vector<4x256xf32> to vector<4xf32>
    %123 = vector.shape_cast %122 : vector<4xf32> to vector<4x1xf32>
    %cst_85 = arith.constant 3.906250e-03 : f32
    %124 = vector.broadcast %cst_85 : f32 to vector<4x1xf32>
    %125 = arith.mulf %123, %124 : vector<4x1xf32>
    %c0_86 = arith.constant 0 : index
    %c0_87 = arith.constant 0 : index
    %126 = vector.load %arg10[%c0_86, %c0_87] : memref<4x1xf32, #tpu.memory_space<vmem>>, vector<4x1xf32>
    %127 = arith.addf %125, %126 : vector<4x1xf32>
    %cst_88 = arith.constant 0.000000e+00 : f32
    %128 = vector.broadcast %cst_88 : f32 to vector<4x1xf32>
    %129 = arith.cmpf ogt, %127, %128 : vector<4x1xf32>
    %cst_89 = arith.constant 2.000000e-01 : f32
    %130 = vector.broadcast %cst_89 : f32 to vector<4x1xf32>
    %131 = arith.mulf %130, %127 : vector<4x1xf32>
    %132 = arith.select %129, %127, %131 : vector<4x1xi1>, vector<4x1xf32>
    %c0_90 = arith.constant 0 : index
    %c0_91 = arith.constant 0 : index
    %133 = vector.load %arg12[%c0_90, %c0_91] : memref<16x1xf32, #tpu.memory_space<vmem>>, vector<16x1xf32>
    %c0_92 = arith.constant 0 : index
    %c0_93 = arith.constant 0 : index
    %134 = vector.load %arg11[%c0_92, %c0_93] : memref<16x4xf32, #tpu.memory_space<vmem>>, vector<16x1xf32>
    %135 = vector.extract_strided_slice %132 {offsets = [0, 0], sizes = [1, 1], strides = [1, 1]} : vector<4x1xf32> to vector<1x1xf32>
    %136 = vector.broadcast %135 : vector<1x1xf32> to vector<16x1xf32>
    %137 = arith.mulf %134, %136 : vector<16x1xf32>
    %138 = arith.addf %133, %137 : vector<16x1xf32>
    %c0_94 = arith.constant 0 : index
    %c1_95 = arith.constant 1 : index
    %139 = vector.load %arg11[%c0_94, %c1_95] : memref<16x4xf32, #tpu.memory_space<vmem>>, vector<16x1xf32>
    %140 = vector.extract_strided_slice %132 {offsets = [1, 0], sizes = [1, 1], strides = [1, 1]} : vector<4x1xf32> to vector<1x1xf32>
    %141 = vector.broadcast %140 : vector<1x1xf32> to vector<16x1xf32>
    %142 = arith.mulf %139, %141 : vector<16x1xf32>
    %143 = arith.addf %138, %142 : vector<16x1xf32>
    %c0_96 = arith.constant 0 : index
    %c2_97 = arith.constant 2 : index
    %144 = vector.load %arg11[%c0_96, %c2_97] : memref<16x4xf32, #tpu.memory_space<vmem>>, vector<16x1xf32>
    %145 = vector.extract_strided_slice %132 {offsets = [2, 0], sizes = [1, 1], strides = [1, 1]} : vector<4x1xf32> to vector<1x1xf32>
    %146 = vector.broadcast %145 : vector<1x1xf32> to vector<16x1xf32>
    %147 = arith.mulf %144, %146 : vector<16x1xf32>
    %148 = arith.addf %143, %147 : vector<16x1xf32>
    %c0_98 = arith.constant 0 : index
    %c3_99 = arith.constant 3 : index
    %149 = vector.load %arg11[%c0_98, %c3_99] : memref<16x4xf32, #tpu.memory_space<vmem>>, vector<16x1xf32>
    %150 = vector.extract_strided_slice %132 {offsets = [3, 0], sizes = [1, 1], strides = [1, 1]} : vector<4x1xf32> to vector<1x1xf32>
    %151 = vector.broadcast %150 : vector<1x1xf32> to vector<16x1xf32>
    %152 = arith.mulf %149, %151 : vector<16x1xf32>
    %153 = arith.addf %148, %152 : vector<16x1xf32>
    %154 = math.tanh %153 : vector<16x1xf32>
    %155 = vector.broadcast %154 : vector<16x1xf32> to vector<16x256xf32>
    %156 = arith.mulf %119, %155 : vector<16x256xf32>
    %cst_100 = arith.constant 1.000000e+00 : f32
    %157 = vector.broadcast %cst_100 : f32 to vector<16x256xf32>
    %158 = arith.mulf %156, %157 : vector<16x256xf32>
    %c0_101 = arith.constant 0 : index
    %c0_102 = arith.constant 0 : index
    %c0_103 = arith.constant 0 : index
    %159 = vector.load %arg1[%c0_101, %c0_102, %c0_103] : memref<1x16x256xf32, #tpu.memory_space<vmem>>, vector<1x16x256xf32>
    %160 = vector.shape_cast %159 : vector<1x16x256xf32> to vector<16x256xf32>
    %161 = arith.addf %158, %160 : vector<16x256xf32>
    %c0_104 = arith.constant 0 : index
    %c0_105 = arith.constant 0 : index
    %c0_106 = arith.constant 0 : index
    %162 = vector.load %arg13[%c0_104, %c0_105, %c0_106] : memref<1x16x256xf32, #tpu.memory_space<vmem>>, vector<1x16x256xf32>
    %163 = vector.shape_cast %162 : vector<1x16x256xf32> to vector<16x256xf32>
    %164 = vector.shape_cast %161 : vector<16x256xf32> to vector<1x16x256xf32>
    tpu.vector_store %arg13[%c0_104, %c0_105, %c0_106], %164 {strides = array<i32>} : memref<1x16x256xf32, #tpu.memory_space<vmem>>, vector<1x16x256xf32>,
    return
  }
  func.func @transform_0(%arg0: i32) -> (i32, i32, i32) {
    %c0_i32 = arith.constant 0 : i32
    %c0_i32_0 = arith.constant 0 : i32
    %c0_i32_1 = arith.constant 0 : i32
    return %arg0, %c0_i32, %c0_i32_0 : i32, i32, i32
  }
  func.func @transform_1(%arg0: i32) -> (i32, i32, i32) {
    %c0_i32 = arith.constant 0 : i32
    %c0_i32_0 = arith.constant 0 : i32
    %c0_i32_1 = arith.constant 0 : i32
    %c0_i32_2 = arith.constant 0 : i32
    return %c0_i32, %c0_i32_0, %c0_i32_1 : i32, i32, i32
  }
  func.func @transform_2(%arg0: i32) -> (i32, i32) {
    %c0_i32 = arith.constant 0 : i32
    %c0_i32_0 = arith.constant 0 : i32
    %c0_i32_1 = arith.constant 0 : i32
    return %c0_i32, %c0_i32_0 : i32, i32
  }
  func.func @transform_3(%arg0: i32) -> (i32, i32) {
    %c0_i32 = arith.constant 0 : i32
    %c0_i32_0 = arith.constant 0 : i32
    %c0_i32_1 = arith.constant 0 : i32
    return %c0_i32, %c0_i32_0 : i32, i32
  }
  func.func @transform_4(%arg0: i32) -> (i32, i32) {
    %c0_i32 = arith.constant 0 : i32
    %c0_i32_0 = arith.constant 0 : i32
    %c0_i32_1 = arith.constant 0 : i32
    return %c0_i32, %c0_i32_0 : i32, i32
  }
  func.func @transform_5(%arg0: i32) -> (i32, i32) {
    %c0_i32 = arith.constant 0 : i32
    %c0_i32_0 = arith.constant 0 : i32
    %c0_i32_1 = arith.constant 0 : i32
    return %c0_i32, %c0_i32_0 : i32, i32
  }
  func.func @transform_6(%arg0: i32) -> (i32, i32) {
    %c0_i32 = arith.constant 0 : i32
    %c0_i32_0 = arith.constant 0 : i32
    %c0_i32_1 = arith.constant 0 : i32
    return %c0_i32, %c0_i32_0 : i32, i32
  }
  func.func @transform_7(%arg0: i32) -> (i32, i32) {
    %c0_i32 = arith.constant 0 : i32
    %c0_i32_0 = arith.constant 0 : i32
    %c0_i32_1 = arith.constant 0 : i32
    return %c0_i32, %c0_i32_0 : i32, i32
  }
  func.func @transform_8(%arg0: i32) -> (i32, i32) {
    %c0_i32 = arith.constant 0 : i32
    %c0_i32_0 = arith.constant 0 : i32
    %c0_i32_1 = arith.constant 0 : i32
    return %c0_i32, %c0_i32_0 : i32, i32
  }
  func.func @transform_9(%arg0: i32) -> (i32, i32) {
    %c0_i32 = arith.constant 0 : i32
    %c0_i32_0 = arith.constant 0 : i32
    %c0_i32_1 = arith.constant 0 : i32
    return %c0_i32, %c0_i32_0 : i32, i32
  }
  func.func @transform_10(%arg0: i32) -> (i32, i32) {
    %c0_i32 = arith.constant 0 : i32
    %c0_i32_0 = arith.constant 0 : i32
    %c0_i32_1 = arith.constant 0 : i32
    return %c0_i32, %c0_i32_0 : i32, i32
  }
  func.func @transform_11(%arg0: i32) -> (i32, i32) {
    %c0_i32 = arith.constant 0 : i32
    %c0_i32_0 = arith.constant 0 : i32
    %c0_i32_1 = arith.constant 0 : i32
    return %c0_i32, %c0_i32_0 : i32, i32
  }
  func.func @transform_12(%arg0: i32) -> (i32, i32, i32) {
    %c0_i32 = arith.constant 0 : i32
    %c0_i32_0 = arith.constant 0 : i32
    %c0_i32_1 = arith.constant 0 : i32
    return %arg0, %c0_i32, %c0_i32_0 : i32, i32, i32
  }
}

</mosaic_0001>

<llo_original>
// kernel: tpu_custom_call.1
$region0: #{tpu_custom_call.1}
  #allocation0 [shape = 'u32[]', space=smem, size = 0x4, offset = 0x4, fixed_abs, tag = 'smem constant byte address 0x4 - core index']
  #allocation1 [shape = 'u32[144,128]{1,0:T(1,128)}', space=vmem, size = 0x12000, scoped, tag = 'internal scratch']
  #allocation2 [shape = 'f32[16,512]{1,0:T(8,128)}', space=vmem, size = 0x8000, scoped, tag = 'scratch operand']
  #allocation3 [shape = 'f32[144,256]{1,0:T(8,128)}', space=vmem, size = 0x24000, scoped, tag = 'scratch operand']
  %s0 = inlined_call_operand.vmem [shape: f32[2,16,256], index: 0, kind: input, shape index: {}]
  %s1 = inlined_call_operand.hbm [shape: f32[9,1,256], index: 1, kind: input, shape index: {}]
  %s2 = inlined_call_operand.vmem [shape: f32[16,1], index: 2, kind: input, shape index: {}]
  %s3 = inlined_call_operand.vmem [shape: f32[16,1], index: 3, kind: input, shape index: {}]
  %s4 = inlined_call_operand.vmem [shape: f32[16,144], index: 4, kind: input, shape index: {}]
  %s5 = inlined_call_operand.vmem [shape: f32[16,1], index: 5, kind: input, shape index: {}]
  %s6 = inlined_call_operand.vmem [shape: f32[16,16], index: 6, kind: input, shape index: {}]
  %s7 = inlined_call_operand.vmem [shape: f32[16,1], index: 7, kind: input, shape index: {}]
  %s8 = inlined_call_operand.vmem [shape: f32[4,16], index: 8, kind: input, shape index: {}]
  %s9 = inlined_call_operand.vmem [shape: f32[4,1], index: 9, kind: input, shape index: {}]
  %s10 = inlined_call_operand.vmem [shape: f32[16,4], index: 10, kind: input, shape index: {}]
  %s11 = inlined_call_operand.vmem [shape: f32[16,1], index: 11, kind: input, shape index: {}]
  %s12 = inlined_call_operand.hbm [shape: f32[2,16,256], index: 12, kind: output, shape index: {}]
  %s13 = sld [smem:[#allocation0]]
  $region85: #{tpu_custom_call.1} parent=0
    _
  %s15 = ssub.s32 1, %s13
  %s16 = scalar_select 0, %s15, %s13
  $region1: #{tpu_custom_call.1} parent=0
    #allocation4 [shape = 'u8[9216]{0}', space=vmem, size = 0x2400, scoped, tag = 'input window, operand 1, single buffered']
    #allocation5 [shape = 's32[2]{0}', space=sflag, size = 0x8, scoped, tag = 'scoped memory for tpu_custom_call.1']
    #allocation6 [shape = 's32[2]{0}', space=sflag, size = 0x8, scoped, tag = 'scoped memory for tpu_custom_call.1']
    #allocation7 [shape = 'u8[32768]{0}', space=vmem, size = 0x8000, scoped, tag = 'output window, operand 0']
    %17 = vsyncpa [#allocation5], 0
    %18 = vsyncpa [#allocation6], 0
    %s19 = scalar_lea.sflag [#allocation6], 1
    %20 = vsyncpa %s19, 0
    loop: start=0, step=1, limit=4
    $region2: #{tpu_custom_call.1} parent=1 // loop_pre_header
      _
    $region3: #{tpu_custom_call.1} parent=1 // loop_header
      %s22 = sphi 0, %s26
      %p23 = scmp.ge.s32.totalorder %s22, 4
      %s32 = sphi 0, %s34
      %s35 = sphi 0, %s32
      %s36 = sphi 0, %s35
      %s52 = sphi 0, %s36
      %s56 = sphi 0, %s56
      %s58 = sphi 0, %s56
      %s59 = sphi 0, %s58
      %s73 = sphi 0, %s59
      %s77 = sphi 0, %s77
      %s79 = sphi 0, %s77
      %s80 = sphi 0, %s79
      %s94 = sphi 0, %s80
      %s98 = sphi 0, %s98
      %s100 = sphi 0, %s98
      %s101 = sphi 0, %s100
      %s115 = sphi 0, %s101
      %s119 = sphi 0, %s119
      %s121 = sphi 0, %s119
      %s122 = sphi 0, %s121
      %s136 = sphi 0, %s122
      %s140 = sphi 0, %s140
      %s142 = sphi 0, %s140
      %s143 = sphi 0, %s142
      %s157 = sphi 0, %s143
      %s161 = sphi 0, %s161
      %s163 = sphi 0, %s161
      %s164 = sphi 0, %s163
      %s178 = sphi 0, %s164
      %s182 = sphi 0, %s182
      %s184 = sphi 0, %s182
      %s185 = sphi 0, %s184
      %s199 = sphi 0, %s185
      %s203 = sphi 0, %s203
      %s205 = sphi 0, %s203
      %s206 = sphi 0, %s205
      %s220 = sphi 0, %s206
      %s224 = sphi 0, %s224
      %s226 = sphi 0, %s224
      %s227 = sphi 0, %s226
      %s241 = sphi 0, %s227
      %s245 = sphi 0, %s245
      %s247 = sphi 0, %s245
      %s248 = sphi 0, %s247
      %s262 = sphi 0, %s248
      %s266 = sphi 0, %s266
      %s268 = sphi 0, %s266
      %s269 = sphi 0, %s268
      %s283 = sphi 0, %s269
      %s289 = sphi 0, %s291
      %s292 = sphi 0, %s289
      %s293 = sphi 0, %s292
      %s309 = sphi 0, %s293
    $region4: #{tpu_custom_call.1} parent=1 // loop_header_branch
      %25 = sbr.rel (%p23) target = $region8
    $region5: #{tpu_custom_call.1} parent=1 // loop_body
      %s27 = ssub.s32 %s22, 1
      %s28 = ssub.s32 %s22, 2
      %s29 = sadd.s32 %s22, 1
      %s30 = ssub.s32 %s22, %s29
      %p31 = scmp.eq.s32.totalorder %s30, 0
      %s33 = sadd.s32 %s32, 1
      %s34 = scalar_select %p31, %s32, %s33
      %p37 = pneg %p31
      %p38 = scmp.eq.s32.totalorder %s22, 1
      %p39 = por %p37, %p38
      %p40 = scmp.ne.s32.totalorder %s32, %s35
      %p41 = scmp.eq.s32.totalorder %s22, 0
      %p42 = por %p40, %p41
      %p43 = scmp.ne.s32.totalorder %s32, %s35
      %p44 = scmp.eq.s32.totalorder %s27, 1
      %p45 = por %p43, %p44
      %p46 = scmp.ne.s32.totalorder %s35, %s36
      %p47 = scmp.eq.s32.totalorder %s27, 0
      %p48 = por %p46, %p47
      %p49 = scmp.ne.s32.totalorder %s35, %s36
      %p50 = scmp.eq.s32.totalorder %s28, 1
      %p51 = por %p49, %p50
      %p53 = scmp.ne.s32.totalorder %s36, %s52
      %p54 = scmp.eq.s32.totalorder %s28, 0
      %p55 = por %p53, %p54
      %s57 = sadd.s32 %s56, 1
      %p60 = scmp.eq.s32.totalorder %s22, 1
      %p61 = scmp.ne.s32.totalorder %s56, %s58
      %p62 = scmp.eq.s32.totalorder %s22, 0
      %p63 = por %p61, %p62
      %p64 = scmp.ne.s32.totalorder %s56, %s58
      %p65 = scmp.eq.s32.totalorder %s27, 1
      %p66 = por %p64, %p65
      %p67 = scmp.ne.s32.totalorder %s58, %s59
      %p68 = scmp.eq.s32.totalorder %s27, 0
      %p69 = por %p67, %p68
      %p70 = scmp.ne.s32.totalorder %s58, %s59
      %p71 = scmp.eq.s32.totalorder %s28, 1
      %p72 = por %p70, %p71
      %p74 = scmp.ne.s32.totalorder %s59, %s73
      %p75 = scmp.eq.s32.totalorder %s28, 0
      %p76 = por %p74, %p75
      %s78 = sadd.s32 %s77, 1
      %p81 = scmp.eq.s32.totalorder %s22, 1
      %p82 = scmp.ne.s32.totalorder %s77, %s79
      %p83 = scmp.eq.s32.totalorder %s22, 0
      %p84 = por %p82, %p83
      %p85 = scmp.ne.s32.totalorder %s77, %s79
      %p86 = scmp.eq.s32.totalorder %s27, 1
      %p87 = por %p85, %p86
      %p88 = scmp.ne.s32.totalorder %s79, %s80
      %p89 = scmp.eq.s32.totalorder %s27, 0
      %p90 = por %p88, %p89
      %p91 = scmp.ne.s32.totalorder %s79, %s80
      %p92 = scmp.eq.s32.totalorder %s28, 1
      %p93 = por %p91, %p92
      %p95 = scmp.ne.s32.totalorder %s80, %s94
      %p96 = scmp.eq.s32.totalorder %s28, 0
      %p97 = por %p95, %p96
      %s99 = sadd.s32 %s98, 1
      %p102 = scmp.eq.s32.totalorder %s22, 1
      %p103 = scmp.ne.s32.totalorder %s98, %s100
      %p104 = scmp.eq.s32.totalorder %s22, 0
      %p105 = por %p103, %p104
      %p106 = scmp.ne.s32.totalorder %s98, %s100
      %p107 = scmp.eq.s32.totalorder %s27, 1
      %p108 = por %p106, %p107
      %p109 = scmp.ne.s32.totalorder %s100, %s101
      %p110 = scmp.eq.s32.totalorder %s27, 0
      %p111 = por %p109, %p110
      %p112 = scmp.ne.s32.totalorder %s100, %s101
      %p113 = scmp.eq.s32.totalorder %s28, 1
      %p114 = por %p112, %p113
      %p116 = scmp.ne.s32.totalorder %s101, %s115
      %p117 = scmp.eq.s32.totalorder %s28, 0
      %p118 = por %p116, %p117
      %s120 = sadd.s32 %s119, 1
      %p123 = scmp.eq.s32.totalorder %s22, 1
      %p124 = scmp.ne.s32.totalorder %s119, %s121
      %p125 = scmp.eq.s32.totalorder %s22, 0
      %p126 = por %p124, %p125
      %p127 = scmp.ne.s32.totalorder %s119, %s121
      %p128 = scmp.eq.s32.totalorder %s27, 1
      %p129 = por %p127, %p128
      %p130 = scmp.ne.s32.totalorder %s121, %s122
      %p131 = scmp.eq.s32.totalorder %s27, 0
      %p132 = por %p130, %p131
      %p133 = scmp.ne.s32.totalorder %s121, %s122
      %p134 = scmp.eq.s32.totalorder %s28, 1
      %p135 = por %p133, %p134
      %p137 = scmp.ne.s32.totalorder %s122, %s136
      %p138 = scmp.eq.s32.totalorder %s28, 0
      %p139 = por %p137, %p138
      %s141 = sadd.s32 %s140, 1
      %p144 = scmp.eq.s32.totalorder %s22, 1
      %p145 = scmp.ne.s32.totalorder %s140, %s142
      %p146 = scmp.eq.s32.totalorder %s22, 0
      %p147 = por %p145, %p146
      %p148 = scmp.ne.s32.totalorder %s140, %s142
      %p149 = scmp.eq.s32.totalorder %s27, 1
      %p150 = por %p148, %p149
      %p151 = scmp.ne.s32.totalorder %s142, %s143
      %p152 = scmp.eq.s32.totalorder %s27, 0
      %p153 = por %p151, %p152
      %p154 = scmp.ne.s32.totalorder %s142, %s143
      %p155 = scmp.eq.s32.totalorder %s28, 1
      %p156 = por %p154, %p155
      %p158 = scmp.ne.s32.totalorder %s143, %s157
      %p159 = scmp.eq.s32.totalorder %s28, 0
      %p160 = por %p158, %p159
      %s162 = sadd.s32 %s161, 1
      %p165 = scmp.eq.s32.totalorder %s22, 1
      %p166 = scmp.ne.s32.totalorder %s161, %s163
      %p167 = scmp.eq.s32.totalorder %s22, 0
      %p168 = por %p166, %p167
      %p169 = scmp.ne.s32.totalorder %s161, %s163
      %p170 = scmp.eq.s32.totalorder %s27, 1
      %p171 = por %p169, %p170
      %p172 = scmp.ne.s32.totalorder %s163, %s164
      %p173 = scmp.eq.s32.totalorder %s27, 0
      %p174 = por %p172, %p173
      %p175 = scmp.ne.s32.totalorder %s163, %s164
      %p176 = scmp.eq.s32.totalorder %s28, 1
      %p177 = por %p175, %p176
      %p179 = scmp.ne.s32.totalorder %s164, %s178
      %p180 = scmp.eq.s32.totalorder %s28, 0
      %p181 = por %p179, %p180
      %s183 = sadd.s32 %s182, 1
      %p186 = scmp.eq.s32.totalorder %s22, 1
      %p187 = scmp.ne.s32.totalorder %s182, %s184
      %p188 = scmp.eq.s32.totalorder %s22, 0
      %p189 = por %p187, %p188
      %p190 = scmp.ne.s32.totalorder %s182, %s184
      %p191 = scmp.eq.s32.totalorder %s27, 1
      %p192 = por %p190, %p191
      %p193 = scmp.ne.s32.totalorder %s184, %s185
      %p194 = scmp.eq.s32.totalorder %s27, 0
      %p195 = por %p193, %p194
      %p196 = scmp.ne.s32.totalorder %s184, %s185
      %p197 = scmp.eq.s32.totalorder %s28, 1
      %p198 = por %p196, %p197
      %p200 = scmp.ne.s32.totalorder %s185, %s199
      %p201 = scmp.eq.s32.totalorder %s28, 0
      %p202 = por %p200, %p201
      %s204 = sadd.s32 %s203, 1
      %p207 = scmp.eq.s32.totalorder %s22, 1
      %p208 = scmp.ne.s32.totalorder %s203, %s205
      %p209 = scmp.eq.s32.totalorder %s22, 0
      %p210 = por %p208, %p209
      %p211 = scmp.ne.s32.totalorder %s203, %s205
      %p212 = scmp.eq.s32.totalorder %s27, 1
      %p213 = por %p211, %p212
      %p214 = scmp.ne.s32.totalorder %s205, %s206
      %p215 = scmp.eq.s32.totalorder %s27, 0
      %p216 = por %p214, %p215
      %p217 = scmp.ne.s32.totalorder %s205, %s206
      %p218 = scmp.eq.s32.totalorder %s28, 1
      %p219 = por %p217, %p218
      %p221 = scmp.ne.s32.totalorder %s206, %s220
      %p222 = scmp.eq.s32.totalorder %s28, 0
      %p223 = por %p221, %p222
      %s225 = sadd.s32 %s224, 1
      %p228 = scmp.eq.s32.totalorder %s22, 1
      %p229 = scmp.ne.s32.totalorder %s224, %s226
      %p230 = scmp.eq.s32.totalorder %s22, 0
      %p231 = por %p229, %p230
      %p232 = scmp.ne.s32.totalorder %s224, %s226
      %p233 = scmp.eq.s32.totalorder %s27, 1
      %p234 = por %p232, %p233
      %p235 = scmp.ne.s32.totalorder %s226, %s227
      %p236 = scmp.eq.s32.totalorder %s27, 0
      %p237 = por %p235, %p236
      %p238 = scmp.ne.s32.totalorder %s226, %s227
      %p239 = scmp.eq.s32.totalorder %s28, 1
      %p240 = por %p238, %p239
      %p242 = scmp.ne.s32.totalorder %s227, %s241
      %p243 = scmp.eq.s32.totalorder %s28, 0
      %p244 = por %p242, %p243
      %s246 = sadd.s32 %s245, 1
      %p249 = scmp.eq.s32.totalorder %s22, 1
      %p250 = scmp.ne.s32.totalorder %s245, %s247
      %p251 = scmp.eq.s32.totalorder %s22, 0
      %p252 = por %p250, %p251
      %p253 = scmp.ne.s32.totalorder %s245, %s247
      %p254 = scmp.eq.s32.totalorder %s27, 1
      %p255 = por %p253, %p254
      %p256 = scmp.ne.s32.totalorder %s247, %s248
      %p257 = scmp.eq.s32.totalorder %s27, 0
      %p258 = por %p256, %p257
      %p259 = scmp.ne.s32.totalorder %s247, %s248
      %p260 = scmp.eq.s32.totalorder %s28, 1
      %p261 = por %p259, %p260
      %p263 = scmp.ne.s32.totalorder %s248, %s262
      %p264 = scmp.eq.s32.totalorder %s28, 0
      %p265 = por %p263, %p264
      %s267 = sadd.s32 %s266, 1
      %p270 = scmp.eq.s32.totalorder %s22, 1
      %p271 = scmp.ne.s32.totalorder %s266, %s268
      %p272 = scmp.eq.s32.totalorder %s22, 0
      %p273 = por %p271, %p272
      %p274 = scmp.ne.s32.totalorder %s266, %s268
      %p275 = scmp.eq.s32.totalorder %s27, 1
      %p276 = por %p274, %p275
      %p277 = scmp.ne.s32.totalorder %s268, %s269
      %p278 = scmp.eq.s32.totalorder %s27, 0
      %p279 = por %p277, %p278
      %p280 = scmp.ne.s32.totalorder %s268, %s269
      %p281 = scmp.eq.s32.totalorder %s28, 1
      %p282 = por %p280, %p281
      %p284 = scmp.ne.s32.totalorder %s269, %s283
      %p285 = scmp.eq.s32.totalorder %s28, 0
      %p286 = por %p284, %p285
      %s287 = ssub.s32 %s22, %s29
      %p288 = scmp.eq.s32.totalorder %s287, 0
      %s290 = sadd.s32 %s289, 1
      %s291 = scalar_select %p288, %s289, %s290
      %p294 = pneg %p288
      %p295 = scmp.eq.s32.totalorder %s22, 1
      %p296 = por %p294, %p295
      %p297 = scmp.ne.s32.totalorder %s289, %s292
      %p298 = scmp.eq.s32.totalorder %s22, 0
      %p299 = por %p297, %p298
      %p300 = scmp.ne.s32.totalorder %s289, %s292
      %p301 = scmp.eq.s32.totalorder %s27, 1
      %p302 = por %p300, %p301
      %p303 = scmp.ne.s32.totalorder %s292, %s293
      %p304 = scmp.eq.s32.totalorder %s27, 0
      %p305 = por %p303, %p304
      %p306 = scmp.ne.s32.totalorder %s292, %s293
      %p307 = scmp.eq.s32.totalorder %s28, 1
      %p308 = por %p306, %p307
      %p310 = scmp.ne.s32.totalorder %s293, %s309
      %p311 = scmp.eq.s32.totalorder %s28, 0
      %p312 = por %p310, %p311
      %p313 = scmp.le.s32.totalorder 1, %s22
      %p314 = scmp.lt.s32.totalorder %s22, 3
      %p315 = pnand %p313, %p314
      %p316 = pneg %p315
      // Predicated region
      $region9: #{tpu_custom_call.1} parent=5 // pred_check
        _
      $region10: #{tpu_custom_call.1} parent=5 // pred_check_branch
        %318 = sbr.rel (%p315) target = $region12
      $region11: #{tpu_custom_call.1} parent=5 // pred_region
        %s319 = ssub.s32 %s22, 1
        // Predicated region
        $region13: #{tpu_custom_call.1} parent=11 // pred_check
          %p320 = pneg %p69
        $region14: #{tpu_custom_call.1} parent=11 // pred_check_branch
          %322 = sbr.rel (%p320) target = $region16
        $region15: #{tpu_custom_call.1} parent=11 // pred_region
          %s324 = ssub.s32 288, 288
          %325 = vsyncadd [#allocation5], %s324
          %s326 = sshll.u32 [#allocation4], 4
          %s327 = int_to_ptr.vmem [resolvable:$true] %s326
          %332 = dma.hbm_to_vmem [thread:$0]  %s1, 288, %s327, [#allocation5], 32, 32, 2
        $region16: #{tpu_custom_call.1} parent=11 // pred_fallthru
          _
        // Predicated region
        $region17: #{tpu_custom_call.1} parent=11 // pred_check
          %p333 = pneg %p90
        $region18: #{tpu_custom_call.1} parent=11 // pred_check_branch
          %335 = sbr.rel (%p333) target = $region20
        $region19: #{tpu_custom_call.1} parent=11 // pred_region
          _
        $region20: #{tpu_custom_call.1} parent=11 // pred_fallthru
          _
        // Predicated region
        $region21: #{tpu_custom_call.1} parent=11 // pred_check
          %p336 = pneg %p111
        $region22: #{tpu_custom_call.1} parent=11 // pred_check_branch
          %338 = sbr.rel (%p336) target = $region24
        $region23: #{tpu_custom_call.1} parent=11 // pred_region
          _
        $region24: #{tpu_custom_call.1} parent=11 // pred_fallthru
          _
        // Predicated region
        $region25: #{tpu_custom_call.1} parent=11 // pred_check
          %p339 = pneg %p132
        $region26: #{tpu_custom_call.1} parent=11 // pred_check_branch
          %341 = sbr.rel (%p339) target = $region28
        $region27: #{tpu_custom_call.1} parent=11 // pred_region
          _
        $region28: #{tpu_custom_call.1} parent=11 // pred_fallthru
          _
        // Predicated region
        $region29: #{tpu_custom_call.1} parent=11 // pred_check
          %p342 = pneg %p153
        $region30: #{tpu_custom_call.1} parent=11 // pred_check_branch
          %344 = sbr.rel (%p342) target = $region32
        $region31: #{tpu_custom_call.1} parent=11 // pred_region
          _
        $region32: #{tpu_custom_call.1} parent=11 // pred_fallthru
          _
        // Predicated region
        $region33: #{tpu_custom_call.1} parent=11 // pred_check
          %p345 = pneg %p174
        $region34: #{tpu_custom_call.1} parent=11 // pred_check_branch
          %347 = sbr.rel (%p345) target = $region36
        $region35: #{tpu_custom_call.1} parent=11 // pred_region
          _
        $region36: #{tpu_custom_call.1} parent=11 // pred_fallthru
          _
        // Predicated region
        $region37: #{tpu_custom_call.1} parent=11 // pred_check
          %p348 = pneg %p195
        $region38: #{tpu_custom_call.1} parent=11 // pred_check_branch
          %350 = sbr.rel (%p348) target = $region40
        $region39: #{tpu_custom_call.1} parent=11 // pred_region
          _
        $region40: #{tpu_custom_call.1} parent=11 // pred_fallthru
          _
        // Predicated region
        $region41: #{tpu_custom_call.1} parent=11 // pred_check
          %p351 = pneg %p216
        $region42: #{tpu_custom_call.1} parent=11 // pred_check_branch
          %353 = sbr.rel (%p351) target = $region44
        $region43: #{tpu_custom_call.1} parent=11 // pred_region
          _
        $region44: #{tpu_custom_call.1} parent=11 // pred_fallthru
          _
        // Predicated region
        $region45: #{tpu_custom_call.1} parent=11 // pred_check
          %p354 = pneg %p237
        $region46: #{tpu_custom_call.1} parent=11 // pred_check_branch
          %356 = sbr.rel (%p354) target = $region48
        $region47: #{tpu_custom_call.1} parent=11 // pred_region
          _
        $region48: #{tpu_custom_call.1} parent=11 // pred_fallthru
          _
        // Predicated region
        $region49: #{tpu_custom_call.1} parent=11 // pred_check
          %p357 = pneg %p258
        $region50: #{tpu_custom_call.1} parent=11 // pred_check_branch
          %359 = sbr.rel (%p357) target = $region52
        $region51: #{tpu_custom_call.1} parent=11 // pred_region
          _
        $region52: #{tpu_custom_call.1} parent=11 // pred_fallthru
          _
        // Predicated region
        $region53: #{tpu_custom_call.1} parent=11 // pred_check
          %p360 = pneg %p279
        $region54: #{tpu_custom_call.1} parent=11 // pred_check_branch
          %362 = sbr.rel (%p360) target = $region56
        $region55: #{tpu_custom_call.1} parent=11 // pred_region
          _
        $region56: #{tpu_custom_call.1} parent=11 // pred_fallthru
          _
      $region12: #{tpu_custom_call.1} parent=5 // pred_fallthru
        _
      %p363 = scmp.lt.s32.totalorder %s22, 2
      // Predicated region
      $region57: #{tpu_custom_call.1} parent=5 // pred_check
        %p364 = pneg %p363
      $region58: #{tpu_custom_call.1} parent=5 // pred_check_branch
        %366 = sbr.rel (%p364) target = $region60
      $region59: #{tpu_custom_call.1} parent=5 // pred_region
        // Predicated region
        $region61: #{tpu_custom_call.1} parent=59 // pred_check
          %p367 = pneg %p42
        $region62: #{tpu_custom_call.1} parent=59 // pred_check_branch
          %369 = sbr.rel (%p367) target = $region64
        $region63: #{tpu_custom_call.1} parent=59 // pred_region
          %p370 = scmp.lt.s32.totalorder %s22, 1
          %s371 = scalar_select %p370, %s22, 1
          %s372 = smul.addr %s371, 4
          %s373 = smul.addr %s372, 8
          %s374 = scalar_lea.vmem %s0, %s373
        $region64: #{tpu_custom_call.1} parent=59 // pred_fallthru
          _
      $region60: #{tpu_custom_call.1} parent=5 // pred_fallthru
        _
      %p375 = scmp.le.s32.totalorder 1, %s22
      %p376 = scmp.lt.s32.totalorder %s22, 3
      %p377 = pnand %p375, %p376
      %p378 = pneg %p377
      // Predicated region
      $region65: #{tpu_custom_call.1} parent=5 // pred_check
        _
      $region66: #{tpu_custom_call.1} parent=5 // pred_check_branch
        %380 = sbr.rel (%p377) target = $region68
      $region67: #{tpu_custom_call.1} parent=5 // pred_region
        %s381 = ssub.s32 %s22, 1
        // Predicated region
        $region69: #{tpu_custom_call.1} parent=67 // pred_check
          %p382 = pneg %p69
        $region70: #{tpu_custom_call.1} parent=67 // pred_check_branch
          %384 = sbr.rel (%p382) target = $region72
        $region71: #{tpu_custom_call.1} parent=67 // pred_region
          %385 = dma.done [#allocation5], 288
        $region72: #{tpu_custom_call.1} parent=67 // pred_fallthru
          _
        %p386 = scmp.lt.s32.totalorder %s27, 1
        %s387 = scalar_select %p386, %s27, 1
        %s388 = smul.addr %s387, 4
        %s389 = smul.addr %s388, 8
        %s390 = scalar_lea.vmem %s0, %s389
        %p391 = pneg %p48
        %p392 = pneg %p45
        %p393 = pneg %p69
        %p394 = pneg %p66
        %p395 = pneg %p90
        %p396 = pneg %p87
        %p397 = pneg %p111
        %p398 = pneg %p108
        %p399 = pneg %p132
        %p400 = pneg %p129
        %p401 = pneg %p153
        %p402 = pneg %p150
        %p403 = pneg %p174
        %p404 = pneg %p171
        %p405 = pneg %p195
        %p406 = pneg %p192
        %p407 = pneg %p216
        %p408 = pneg %p213
        %p409 = pneg %p237
        %p410 = pneg %p234
        %p411 = pneg %p258
        %p412 = pneg %p255
        %p413 = pneg %p279
        %p414 = pneg %p276
        %p415 = pneg %p305
        %p416 = pneg %p302
        %s417 = sand.u32 %s292, 1
        %s418 = scalar_lea.sflag [#allocation6], %s417
        %s419 = sand.u32 %s292, 1
        %s420 = smul.addr %s419, 32
        %s421 = scalar_lea.vmem [#allocation7], %s420
        %p422 = scmp.lt.s32.totalorder %s27, 1
        %s423 = scalar_select %p422, %s27, 1
        %s424 = smul.addr %s423, 4
        %s425 = smul.addr %s424, 8
        %s426 = scalar_lea.vmem %s0, %s425
        %v427 = vld [vmem:[%s426] sm:$0xff]
        %v428 = vld [vmem:[%s426 + $0x8] sm:$0xff]
        %v429 = vld [vmem:[%s426 + $0x10] sm:$0xff]
        %v430 = vld [vmem:[%s426 + $0x18] sm:$0xff]
        %v431 = vld [vmem:[%s2] sm:$0xff]
        %v432 = vld [vmem:[%s2 + $0x8] sm:$0xff]
        %434 = vset.pattern.permute.xlu0 0
        %435 = vperm.xlu0 %434, %v431
        %v436 = vpop.permute.xlu0 %435
        %439 = vset.pattern.permute.xlu0 0
        %440 = vperm.xlu0 %439, %v432
        %v441 = vpop.permute.xlu0 %440
        %v443 = vmul.f32 %v427, %v436
        %v444 = vmul.f32 %v428, %v436
        %v445 = vmul.f32 %v429, %v441
        %v446 = vmul.f32 %v430, %v441
        %v447 = vld [vmem:[%s3] sm:$0xff]
        %v448 = vld [vmem:[%s3 + $0x8] sm:$0xff]
        %450 = vset.pattern.permute.xlu0 0
        %451 = vperm.xlu0 %450, %v447
        %v452 = vpop.permute.xlu0 %451
        %455 = vset.pattern.permute.xlu0 0
        %456 = vperm.xlu0 %455, %v448
        %v457 = vpop.permute.xlu0 %456
        %v459 = vadd.f32 %v443, %v452
        %v460 = vadd.f32 %v444, %v452
        %v461 = vadd.f32 %v445, %v457
        %v462 = vadd.f32 %v446, %v457
        %463 = vst [vmem:[#allocation2 + $0x8] sm:$0xff] %v459
        %464 = vst [vmem:[#allocation2 + $0x10] sm:$0xff] %v460
        %465 = vst [vmem:[#allocation2 + $0x28] sm:$0xff] %v461
        %466 = vst [vmem:[#allocation2 + $0x30] sm:$0xff] %v462
        %v467 = vld [vmem:[#allocation2] sm:$0xff]
        %v468 = vld [vmem:[#allocation2 + $0x8] sm:$0xff]
        %v469 = vld [vmem:[#allocation2 + $0x10] sm:$0xff]
        %v470 = vld [vmem:[#allocation2 + $0x20] sm:$0xff]
        %v471 = vld [vmem:[#allocation2 + $0x28] sm:$0xff]
        %v472 = vld [vmem:[#allocation2 + $0x30] sm:$0xff]
        %v473 = vld [vmem:[#allocation4] sm:$0x3]
        %vm474 = vcmp.ne.f32.partialorder %v473, 0.0
        %v475 = vsel %vm474, 1, 0
        %v476 = vlaneseq
        %v477 = vshrl.u32 %v476, 7
        %v478 = vsub.s32 0, %v477
        %v479 = vrot.slane %v475, %v478
        %v480 = vlaneseq
        %v481 = vshrl.u32 %v480, 7
        %v482 = vsub.s32 1, %v481
        %v483 = vrot.slane %v475, %v482
        %vm484 = vcmp.eq.s32.totalorder %v479, 1
        %vm485 = vcmp.eq.s32.totalorder %v483, 1
        %492 = vrot.lane.b32.xlu0 %v467, 34
        %v493 = vpop.permute.xlu0 %492
        %494 = vrot.lane.b32.xlu0 %v468, 34
        %v495 = vpop.permute.xlu0 %494
        %496 = vrot.lane.b32.xlu0 %v469, 34
        %v497 = vpop.permute.xlu0 %496
        %498 = vrot.lane.b32.xlu0 %v470, 34
        %v499 = vpop.permute.xlu0 %498
        %500 = vrot.lane.b32.xlu0 %v471, 34
        %v501 = vpop.permute.xlu0 %500
        %502 = vrot.lane.b32.xlu0 %v472, 34
        %v503 = vpop.permute.xlu0 %502
        %vm504 = vcmask 277504
        %v505 = vsel %vm504, %v493, %v495
        %v506 = vsel %vm504, %v495, %v497
        %v507 = vsel %vm504, %v499, %v501
        %v508 = vsel %vm504, %v501, %v503
        %v513 = vsel %vm484, %v505, 0.0
        %v514 = vsel %vm485, %v506, 0.0
        %v515 = vsel %vm484, %v507, 0.0
        %v516 = vsel %vm485, %v508, 0.0
        %517 = vst [vmem:[#allocation3] sm:$0xff] %v513
        %518 = vst [vmem:[#allocation3 + $0x8] sm:$0xff] %v514
        %519 = vst [vmem:[#allocation3 + $0x10] sm:$0xff] %v515
        %520 = vst [vmem:[#allocation3 + $0x18] sm:$0xff] %v516
        %v521 = vld [vmem:[#allocation2] sm:$0xff]
        %v522 = vld [vmem:[#allocation2 + $0x8] sm:$0xff]
        %v523 = vld [vmem:[#allocation2 + $0x10] sm:$0xff]
        %v524 = vld [vmem:[#allocation2 + $0x20] sm:$0xff]
        %v525 = vld [vmem:[#allocation2 + $0x28] sm:$0xff]
        %v526 = vld [vmem:[#allocation2 + $0x30] sm:$0xff]
        %s527 = scalar_lea.vmem [#allocation4], 2
        %v528 = vld [vmem:[%s527] sm:$0x3]
        %vm529 = vcmp.ne.f32.partialorder %v528, 0.0
        %v530 = vsel %vm529, 1, 0
        %v531 = vlaneseq
        %v532 = vshrl.u32 %v531, 7
        %v533 = vsub.s32 0, %v532
        %v534 = vrot.slane %v530, %v533
        %v535 = vlaneseq
        %v536 = vshrl.u32 %v535, 7
        %v537 = vsub.s32 1, %v536
        %v538 = vrot.slane %v530, %v537
        %vm539 = vcmp.eq.s32.totalorder %v534, 1
        %vm540 = vcmp.eq.s32.totalorder %v538, 1
        %547 = vrot.lane.b32.xlu0 %v521, 32
        %v548 = vpop.permute.xlu0 %547
        %549 = vrot.lane.b32.xlu0 %v522, 32
        %v550 = vpop.permute.xlu0 %549
        %551 = vrot.lane.b32.xlu0 %v523, 32
        %v552 = vpop.permute.xlu0 %551
        %553 = vrot.lane.b32.xlu0 %v524, 32
        %v554 = vpop.permute.xlu0 %553
        %555 = vrot.lane.b32.xlu0 %v525, 32
        %v556 = vpop.permute.xlu0 %555
        %557 = vrot.lane.b32.xlu0 %v526, 32
        %v558 = vpop.permute.xlu0 %557
        %vm559 = vcmask 261120
        %v560 = vsel %vm559, %v548, %v550
        %v561 = vsel %vm559, %v550, %v552
        %v562 = vsel %vm559, %v554, %v556
        %v563 = vsel %vm559, %v556, %v558
        %v568 = vsel %vm539, %v560, 0.0
        %v569 = vsel %vm540, %v561, 0.0
        %v570 = vsel %vm539, %v562, 0.0
        %v571 = vsel %vm540, %v563, 0.0
        %572 = vst [vmem:[#allocation3 + $0x20] sm:$0xff] %v568
        %573 = vst [vmem:[#allocation3 + $0x28] sm:$0xff] %v569
        %574 = vst [vmem:[#allocation3 + $0x30] sm:$0xff] %v570
        %575 = vst [vmem:[#allocation3 + $0x38] sm:$0xff] %v571
        %v576 = vld [vmem:[#allocation2] sm:$0xff]
        %v577 = vld [vmem:[#allocation2 + $0x8] sm:$0xff]
        %v578 = vld [vmem:[#allocation2 + $0x10] sm:$0xff]
        %v579 = vld [vmem:[#allocation2 + $0x20] sm:$0xff]
        %v580 = vld [vmem:[#allocation2 + $0x28] sm:$0xff]
        %v581 = vld [vmem:[#allocation2 + $0x30] sm:$0xff]
        %s582 = scalar_lea.vmem [#allocation4], 4
        %v583 = vld [vmem:[%s582] sm:$0x3]
        %vm584 = vcmp.ne.f32.partialorder %v583, 0.0
        %v585 = vsel %vm584, 1, 0
        %v586 = vlaneseq
        %v587 = vshrl.u32 %v586, 7
        %v588 = vsub.s32 0, %v587
        %v589 = vrot.slane %v585, %v588
        %v590 = vlaneseq
        %v591 = vshrl.u32 %v590, 7
        %v592 = vsub.s32 1, %v591
        %v593 = vrot.slane %v585, %v592
        %vm594 = vcmp.eq.s32.totalorder %v589, 1
        %vm595 = vcmp.eq.s32.totalorder %v593, 1
        %602 = vrot.lane.b32.xlu0 %v576, 30
        %v603 = vpop.permute.xlu0 %602
        %604 = vrot.lane.b32.xlu0 %v577, 30
        %v605 = vpop.permute.xlu0 %604
        %606 = vrot.lane.b32.xlu0 %v578, 30
        %v607 = vpop.permute.xlu0 %606
        %608 = vrot.lane.b32.xlu0 %v579, 30
        %v609 = vpop.permute.xlu0 %608
        %610 = vrot.lane.b32.xlu0 %v580, 30
        %v611 = vpop.permute.xlu0 %610
        %612 = vrot.lane.b32.xlu0 %v581, 30
        %v613 = vpop.permute.xlu0 %612
        %vm614 = vcmask 244736
        %v615 = vsel %vm614, %v603, %v605
        %v616 = vsel %vm614, %v605, %v607
        %v617 = vsel %vm614, %v609, %v611
        %v618 = vsel %vm614, %v611, %v613
        %v623 = vsel %vm594, %v615, 0.0
        %v624 = vsel %vm595, %v616, 0.0
        %v625 = vsel %vm594, %v617, 0.0
        %v626 = vsel %vm595, %v618, 0.0
        %627 = vst [vmem:[#allocation3 + $0x40] sm:$0xff] %v623
        %628 = vst [vmem:[#allocation3 + $0x48] sm:$0xff] %v624
        %629 = vst [vmem:[#allocation3 + $0x50] sm:$0xff] %v625
        %630 = vst [vmem:[#allocation3 + $0x58] sm:$0xff] %v626
        %v631 = vld [vmem:[#allocation2] sm:$0xff]
        %v632 = vld [vmem:[#allocation2 + $0x8] sm:$0xff]
        %v633 = vld [vmem:[#allocation2 + $0x10] sm:$0xff]
        %v634 = vld [vmem:[#allocation2 + $0x20] sm:$0xff]
        %v635 = vld [vmem:[#allocation2 + $0x28] sm:$0xff]
        %v636 = vld [vmem:[#allocation2 + $0x30] sm:$0xff]
        %s637 = scalar_lea.vmem [#allocation4], 6
        %v638 = vld [vmem:[%s637] sm:$0x3]
        %vm639 = vcmp.ne.f32.partialorder %v638, 0.0
        %v640 = vsel %vm639, 1, 0
        %v641 = vlaneseq
        %v642 = vshrl.u32 %v641, 7
        %v643 = vsub.s32 0, %v642
        %v644 = vrot.slane %v640, %v643
        %v645 = vlaneseq
        %v646 = vshrl.u32 %v645, 7
        %v647 = vsub.s32 1, %v646
        %v648 = vrot.slane %v640, %v647
        %vm649 = vcmp.eq.s32.totalorder %v644, 1
        %vm650 = vcmp.eq.s32.totalorder %v648, 1
        %657 = vrot.lane.b32.xlu0 %v631, 2
        %v658 = vpop.permute.xlu0 %657
        %659 = vrot.lane.b32.xlu0 %v632, 2
        %v660 = vpop.permute.xlu0 %659
        %661 = vrot.lane.b32.xlu0 %v633, 2
        %v662 = vpop.permute.xlu0 %661
        %663 = vrot.lane.b32.xlu0 %v634, 2
        %v664 = vpop.permute.xlu0 %663
        %665 = vrot.lane.b32.xlu0 %v635, 2
        %v666 = vpop.permute.xlu0 %665
        %667 = vrot.lane.b32.xlu0 %v636, 2
        %v668 = vpop.permute.xlu0 %667
        %vm669 = vcmask 15360
        %v670 = vsel %vm669, %v658, %v660
        %v671 = vsel %vm669, %v660, %v662
        %v672 = vsel %vm669, %v664, %v666
        %v673 = vsel %vm669, %v666, %v668
        %v678 = vsel %vm649, %v670, 0.0
        %v679 = vsel %vm650, %v671, 0.0
        %v680 = vsel %vm649, %v672, 0.0
        %v681 = vsel %vm650, %v673, 0.0
        %682 = vst [vmem:[#allocation3 + $0x60] sm:$0xff] %v678
        %683 = vst [vmem:[#allocation3 + $0x68] sm:$0xff] %v679
        %684 = vst [vmem:[#allocation3 + $0x70] sm:$0xff] %v680
        %685 = vst [vmem:[#allocation3 + $0x78] sm:$0xff] %v681
        %v686 = vld [vmem:[#allocation2 + $0x8] sm:$0xff]
        %v687 = vld [vmem:[#allocation2 + $0x10] sm:$0xff]
        %v688 = vld [vmem:[#allocation2 + $0x28] sm:$0xff]
        %v689 = vld [vmem:[#allocation2 + $0x30] sm:$0xff]
        %s690 = scalar_lea.vmem [#allocation4], 8
        %v691 = vld [vmem:[%s690] sm:$0x3]
        %vm692 = vcmp.ne.f32.partialorder %v691, 0.0
        %v693 = vsel %vm692, 1, 0
        %v694 = vlaneseq
        %v695 = vshrl.u32 %v694, 7
        %v696 = vsub.s32 0, %v695
        %v697 = vrot.slane %v693, %v696
        %v698 = vlaneseq
        %v699 = vshrl.u32 %v698, 7
        %v700 = vsub.s32 1, %v699
        %v701 = vrot.slane %v693, %v700
        %vm702 = vcmp.eq.s32.totalorder %v697, 1
        %vm703 = vcmp.eq.s32.totalorder %v701, 1
        %v704 = vsel %vm702, %v686, 0.0
        %v705 = vsel %vm703, %v687, 0.0
        %v706 = vsel %vm702, %v688, 0.0
        %v707 = vsel %vm703, %v689, 0.0
        %708 = vst [vmem:[#allocation3 + $0x80] sm:$0xff] %v704
        %709 = vst [vmem:[#allocation3 + $0x88] sm:$0xff] %v705
        %710 = vst [vmem:[#allocation3 + $0x90] sm:$0xff] %v706
        %711 = vst [vmem:[#allocation3 + $0x98] sm:$0xff] %v707
        %v712 = vld [vmem:[#allocation2 + $0x8] sm:$0xff]
        %v713 = vld [vmem:[#allocation2 + $0x10] sm:$0xff]
        %v714 = vld [vmem:[#allocation2 + $0x18] sm:$0xff]
        %v715 = vld [vmem:[#allocation2 + $0x28] sm:$0xff]
        %v716 = vld [vmem:[#allocation2 + $0x30] sm:$0xff]
        %v717 = vld [vmem:[#allocation2 + $0x38] sm:$0xff]
        %s718 = scalar_lea.vmem [#allocation4], 10
        %v719 = vld [vmem:[%s718] sm:$0x3]
        %vm720 = vcmp.ne.f32.partialorder %v719, 0.0
        %v721 = vsel %vm720, 1, 0
        %v722 = vlaneseq
        %v723 = vshrl.u32 %v722, 7
        %v724 = vsub.s32 0, %v723
        %v725 = vrot.slane %v721, %v724
        %v726 = vlaneseq
        %v727 = vshrl.u32 %v726, 7
        %v728 = vsub.s32 1, %v727
        %v729 = vrot.slane %v721, %v728
        %vm730 = vcmp.eq.s32.totalorder %v725, 1
        %vm731 = vcmp.eq.s32.totalorder %v729, 1
        %738 = vrot.lane.b32.xlu0 %v712, 126
        %v739 = vpop.permute.xlu0 %738
        %740 = vrot.lane.b32.xlu0 %v713, 126
        %v741 = vpop.permute.xlu0 %740
        %742 = vrot.lane.b32.xlu0 %v714, 126
        %v743 = vpop.permute.xlu0 %742
        %744 = vrot.lane.b32.xlu0 %v715, 126
        %v745 = vpop.permute.xlu0 %744
        %746 = vrot.lane.b32.xlu0 %v716, 126
        %v747 = vpop.permute.xlu0 %746
        %748 = vrot.lane.b32.xlu0 %v717, 126
        %v749 = vpop.permute.xlu0 %748
        %vm750 = vcmask 1031168
        %v751 = vsel %vm750, %v739, %v741
        %v752 = vsel %vm750, %v741, %v743
        %v753 = vsel %vm750, %v745, %v747
        %v754 = vsel %vm750, %v747, %v749
        %v759 = vsel %vm730, %v751, 0.0
        %v760 = vsel %vm731, %v752, 0.0
        %v761 = vsel %vm730, %v753, 0.0
        %v762 = vsel %vm731, %v754, 0.0
        %763 = vst [vmem:[#allocation3 + $0xa0] sm:$0xff] %v759
        %764 = vst [vmem:[#allocation3 + $0xa8] sm:$0xff] %v760
        %765 = vst [vmem:[#allocation3 + $0xb0] sm:$0xff] %v761
        %766 = vst [vmem:[#allocation3 + $0xb8] sm:$0xff] %v762
        %v767 = vld [vmem:[#allocation2 + $0x8] sm:$0xff]
        %v768 = vld [vmem:[#allocation2 + $0x10] sm:$0xff]
        %v769 = vld [vmem:[#allocation2 + $0x18] sm:$0xff]
        %v770 = vld [vmem:[#allocation2 + $0x28] sm:$0xff]
        %v771 = vld [vmem:[#allocation2 + $0x30] sm:$0xff]
        %v772 = vld [vmem:[#allocation2 + $0x38] sm:$0xff]
        %s773 = scalar_lea.vmem [#allocation4], 12
        %v774 = vld [vmem:[%s773] sm:$0x3]
        %vm775 = vcmp.ne.f32.partialorder %v774, 0.0
        %v776 = vsel %vm775, 1, 0
        %v777 = vlaneseq
        %v778 = vshrl.u32 %v777, 7
        %v779 = vsub.s32 0, %v778
        %v780 = vrot.slane %v776, %v779
        %v781 = vlaneseq
        %v782 = vshrl.u32 %v781, 7
        %v783 = vsub.s32 1, %v782
        %v784 = vrot.slane %v776, %v783
        %vm785 = vcmp.eq.s32.totalorder %v780, 1
        %vm786 = vcmp.eq.s32.totalorder %v784, 1
        %793 = vrot.lane.b32.xlu0 %v767, 98
        %v794 = vpop.permute.xlu0 %793
        %795 = vrot.lane.b32.xlu0 %v768, 98
        %v796 = vpop.permute.xlu0 %795
        %797 = vrot.lane.b32.xlu0 %v769, 98
        %v798 = vpop.permute.xlu0 %797
        %799 = vrot.lane.b32.xlu0 %v770, 98
        %v800 = vpop.permute.xlu0 %799
        %801 = vrot.lane.b32.xlu0 %v771, 98
        %v802 = vpop.permute.xlu0 %801
        %803 = vrot.lane.b32.xlu0 %v772, 98
        %v804 = vpop.permute.xlu0 %803
        %vm805 = vcmask 801792
        %v806 = vsel %vm805, %v794, %v796
        %v807 = vsel %vm805, %v796, %v798
        %v808 = vsel %vm805, %v800, %v802
        %v809 = vsel %vm805, %v802, %v804
        %v814 = vsel %vm785, %v806, 0.0
        %v815 = vsel %vm786, %v807, 0.0
        %v816 = vsel %vm785, %v808, 0.0
        %v817 = vsel %vm786, %v809, 0.0
        %818 = vst [vmem:[#allocation3 + $0xc0] sm:$0xff] %v814
        %819 = vst [vmem:[#allocation3 + $0xc8] sm:$0xff] %v815
        %820 = vst [vmem:[#allocation3 + $0xd0] sm:$0xff] %v816
        %821 = vst [vmem:[#allocation3 + $0xd8] sm:$0xff] %v817
        %v822 = vld [vmem:[#allocation2 + $0x8] sm:$0xff]
        %v823 = vld [vmem:[#allocation2 + $0x10] sm:$0xff]
        %v824 = vld [vmem:[#allocation2 + $0x18] sm:$0xff]
        %v825 = vld [vmem:[#allocation2 + $0x28] sm:$0xff]
        %v826 = vld [vmem:[#allocation2 + $0x30] sm:$0xff]
        %v827 = vld [vmem:[#allocation2 + $0x38] sm:$0xff]
        %s828 = scalar_lea.vmem [#allocation4], 14
        %v829 = vld [vmem:[%s828] sm:$0x3]
        %vm830 = vcmp.ne.f32.partialorder %v829, 0.0
        %v831 = vsel %vm830, 1, 0
        %v832 = vlaneseq
        %v833 = vshrl.u32 %v832, 7
        %v834 = vsub.s32 0, %v833
        %v835 = vrot.slane %v831, %v834
        %v836 = vlaneseq
        %v837 = vshrl.u32 %v836, 7
        %v838 = vsub.s32 1, %v837
        %v839 = vrot.slane %v831, %v838
        %vm840 = vcmp.eq.s32.totalorder %v835, 1
        %vm841 = vcmp.eq.s32.totalorder %v839, 1
        %848 = vrot.lane.b32.xlu0 %v822, 96
        %v849 = vpop.permute.xlu0 %848
        %850 = vrot.lane.b32.xlu0 %v823, 96
        %v851 = vpop.permute.xlu0 %850
        %852 = vrot.lane.b32.xlu0 %v824, 96
        %v853 = vpop.permute.xlu0 %852
        %854 = vrot.lane.b32.xlu0 %v825, 96
        %v855 = vpop.permute.xlu0 %854
        %856 = vrot.lane.b32.xlu0 %v826, 96
        %v857 = vpop.permute.xlu0 %856
        %858 = vrot.lane.b32.xlu0 %v827, 96
        %v859 = vpop.permute.xlu0 %858
        %vm860 = vcmask 785408
        %v861 = vsel %vm860, %v849, %v851
        %v862 = vsel %vm860, %v851, %v853
        %v863 = vsel %vm860, %v855, %v857
        %v864 = vsel %vm860, %v857, %v859
        %v869 = vsel %vm840, %v861, 0.0
        %v870 = vsel %vm841, %v862, 0.0
        %v871 = vsel %vm840, %v863, 0.0
        %v872 = vsel %vm841, %v864, 0.0
        %873 = vst [vmem:[#allocation3 + $0xe0] sm:$0xff] %v869
        %874 = vst [vmem:[#allocation3 + $0xe8] sm:$0xff] %v870
        %875 = vst [vmem:[#allocation3 + $0xf0] sm:$0xff] %v871
        %876 = vst [vmem:[#allocation3 + $0xf8] sm:$0xff] %v872
        %v877 = vld [vmem:[#allocation2 + $0x8] sm:$0xff]
        %v878 = vld [vmem:[#allocation2 + $0x10] sm:$0xff]
        %v879 = vld [vmem:[#allocation2 + $0x18] sm:$0xff]
        %v880 = vld [vmem:[#allocation2 + $0x28] sm:$0xff]
        %v881 = vld [vmem:[#allocation2 + $0x30] sm:$0xff]
        %v882 = vld [vmem:[#allocation2 + $0x38] sm:$0xff]
        %s883 = scalar_lea.vmem [#allocation4], 16
        %v884 = vld [vmem:[%s883] sm:$0x3]
        %vm885 = vcmp.ne.f32.partialorder %v884, 0.0
        %v886 = vsel %vm885, 1, 0
        %v887 = vlaneseq
        %v888 = vshrl.u32 %v887, 7
        %v889 = vsub.s32 0, %v888
        %v890 = vrot.slane %v886, %v889
        %v891 = vlaneseq
        %v892 = vshrl.u32 %v891, 7
        %v893 = vsub.s32 1, %v892
        %v894 = vrot.slane %v886, %v893
        %vm895 = vcmp.eq.s32.totalorder %v890, 1
        %vm896 = vcmp.eq.s32.totalorder %v894, 1
        %903 = vrot.lane.b32.xlu0 %v877, 94
        %v904 = vpop.permute.xlu0 %903
        %905 = vrot.lane.b32.xlu0 %v878, 94
        %v906 = vpop.permute.xlu0 %905
        %907 = vrot.lane.b32.xlu0 %v879, 94
        %v908 = vpop.permute.xlu0 %907
        %909 = vrot.lane.b32.xlu0 %v880, 94
        %v910 = vpop.permute.xlu0 %909
        %911 = vrot.lane.b32.xlu0 %v881, 94
        %v912 = vpop.permute.xlu0 %911
        %913 = vrot.lane.b32.xlu0 %v882, 94
        %v914 = vpop.permute.xlu0 %913
        %vm915 = vcmask 769024
        %v916 = vsel %vm915, %v904, %v906
        %v917 = vsel %vm915, %v906, %v908
        %v918 = vsel %vm915, %v910, %v912
        %v919 = vsel %vm915, %v912, %v914
        %v924 = vsel %vm895, %v916, 0.0
        %v925 = vsel %vm896, %v917, 0.0
        %v926 = vsel %vm895, %v918, 0.0
        %v927 = vsel %vm896, %v919, 0.0
        %928 = vst [vmem:[#allocation3 + $0x100] sm:$0xff] %v924
        %929 = vst [vmem:[#allocation3 + $0x108] sm:$0xff] %v925
        %930 = vst [vmem:[#allocation3 + $0x110] sm:$0xff] %v926
        %931 = vst [vmem:[#allocation3 + $0x118] sm:$0xff] %v927
        %v932 = vld [vmem:[%s4] sm:$0xff]
        %v933 = vld [vmem:[%s4 + $0x8] sm:$0xff]
        %v934 = vld [vmem:[%s4 + $0x10] sm:$0xff]
        %v935 = vld [vmem:[%s4 + $0x18] sm:$0xff]
        %v936 = vld [vmem:[#allocation3] sm:$0xff]
        %v937 = vld [vmem:[#allocation3 + $0x8] sm:$0xff]
        %v938 = vld [vmem:[#allocation3 + $0x10] sm:$0xff]
        %v939 = vld [vmem:[#allocation3 + $0x18] sm:$0xff]
        %v940 = vld [vmem:[#allocation3 + $0x20] sm:$0xff]
        %v941 = vld [vmem:[#allocation3 + $0x28] sm:$0xff]
        %v942 = vld [vmem:[#allocation3 + $0x30] sm:$0xff]
        %v943 = vld [vmem:[#allocation3 + $0x38] sm:$0xff]
        %v944 = vld [vmem:[#allocation3 + $0x40] sm:$0xff]
        %v945 = vld [vmem:[#allocation3 + $0x48] sm:$0xff]
        %v946 = vld [vmem:[#allocation3 + $0x50] sm:$0xff]
        %v947 = vld [vmem:[#allocation3 + $0x58] sm:$0xff]
        %v948 = vld [vmem:[#allocation3 + $0x60] sm:$0xff]
        %v949 = vld [vmem:[#allocation3 + $0x68] sm:$0xff]
        %v950 = vld [vmem:[#allocation3 + $0x70] sm:$0xff]
        %v951 = vld [vmem:[#allocation3 + $0x78] sm:$0xff]
        %v952 = vld [vmem:[#allocation3 + $0x80] sm:$0xff]
        %v953 = vld [vmem:[#allocation3 + $0x88] sm:$0xff]
        %v954 = vld [vmem:[#allocation3 + $0x90] sm:$0xff]
        %v955 = vld [vmem:[#allocation3 + $0x98] sm:$0xff]
        %v956 = vld [vmem:[#allocation3 + $0xa0] sm:$0xff]
        %v957 = vld [vmem:[#allocation3 + $0xa8] sm:$0xff]
        %v958 = vld [vmem:[#allocation3 + $0xb0] sm:$0xff]
        %v959 = vld [vmem:[#allocation3 + $0xb8] sm:$0xff]
        %v960 = vld [vmem:[#allocation3 + $0xc0] sm:$0xff]
        %v961 = vld [vmem:[#allocation3 + $0xc8] sm:$0xff]
        %v962 = vld [vmem:[#allocation3 + $0xd0] sm:$0xff]
        %v963 = vld [vmem:[#allocation3 + $0xd8] sm:$0xff]
        %v964 = vld [vmem:[#allocation3 + $0xe0] sm:$0xff]
        %v965 = vld [vmem:[#allocation3 + $0xe8] sm:$0xff]
        %v966 = vld [vmem:[#allocation3 + $0xf0] sm:$0xff]
        %v967 = vld [vmem:[#allocation3 + $0xf8] sm:$0xff]
        %v968 = vld [vmem:[#allocation3 + $0x100] sm:$0xff]
        %v969 = vld [vmem:[#allocation3 + $0x108] sm:$0xff]
        %v970 = vld [vmem:[#allocation3 + $0x110] sm:$0xff]
        %v971 = vld [vmem:[#allocation3 + $0x118] sm:$0xff]
        %v972 = vld [vmem:[%s5] sm:$0xff]
        %v973 = vld [vmem:[%s5 + $0x8] sm:$0xff]
        %975 = vset.pattern.permute.xlu0 0
        %976 = vperm.xlu0 %975, %v972
        %v977 = vpop.permute.xlu0 %976
        %980 = vset.pattern.permute.xlu0 0
        %981 = vperm.xlu0 %980, %v973
        %v982 = vpop.permute.xlu0 %981
        %vm984 = vcmask 130048
        %v986 = vsel %vm984, %v933, 0
        %v989 = vsel %vm984, %v935, 0
        %991 = vmatprep.subr.mxu0 %v937
        %992 = vmatpush1.msra.mxu0 %v936
        %993 = vmatprep.subr.mxu0 %v939
        %994 = vmatpush1.msra.mxu0 %v938
        %995 = vmatprep.subr.mxu0 %v941
        %996 = vmatpush1.msra.mxu0 %v940
        %997 = vmatprep.subr.mxu0 %v943
        %998 = vmatpush1.msra.mxu0 %v942
        %999 = vmatprep.subr.mxu0 %v945
        %1000 = vmatpush1.msra.mxu0 %v944
        %1001 = vmatprep.subr.mxu0 %v947
        %1002 = vmatpush1.msra.mxu0 %v946
        %1003 = vmatprep.subr.mxu0 %v949
        %1004 = vmatpush1.msra.mxu0 %v948
        %1005 = vmatprep.subr.mxu0 %v951
        %1006 = vmatpush1.msra.mxu0 %v950
        %1007 = vmatprep.subr.mxu0 %v953
        %1008 = vmatpush1.msra.mxu0 %v952
        %1009 = vmatprep.subr.mxu0 %v955
        %1010 = vmatpush1.msra.mxu0 %v954
        %1011 = vmatprep.subr.mxu0 %v957
        %1012 = vmatpush1.msra.mxu0 %v956
        %1013 = vmatprep.subr.mxu0 %v959
        %1014 = vmatpush1.msra.mxu0 %v958
        %1015 = vmatprep.subr.mxu0 %v961
        %1016 = vmatpush1.msra.mxu0 %v960
        %1017 = vmatprep.subr.mxu0 %v963
        %1018 = vmatpush1.msra.mxu0 %v962
        %1019 = vmatprep.subr.mxu0 %v965
        %1020 = vmatpush1.msra.mxu0 %v964
        %1021 = vmatprep.subr.mxu0 %v967
        %1022 = vmatpush1.msra.mxu0 %v966
        %1023 = vmatprep.subr.mxu0 %v969
        %1024 = vmatpush1.msra.mxu0 %v968
        %1025 = vmatprep.subr.mxu0 %v971
        %1026 = vmatpush1.msra.mxu0 %v970
        %1027 = vmatprep.subr.mxu0 0.0
        %1028 = vmatpush1.msra.mxu0 0.0
        %1029 = vmatprep.subr.mxu0 0.0
        %1030 = vmatpush1.msra.mxu0 0.0
        %1031 = vmatprep.subr.mxu0 0.0
        %1032 = vmatpush1.msra.mxu0 0.0
        %1033 = vmatprep.subr.mxu0 0.0
        %1034 = vmatpush1.msra.mxu0 0.0
        %1035 = vmatprep.subr.mxu0 0.0
        %1036 = vmatpush1.msra.mxu0 0.0
        %1037 = vmatprep.subr.mxu0 0.0
        %1038 = vmatpush1.msra.mxu0 0.0
        %1039 = vmatprep.subr.mxu0 0.0
        %1040 = vmatpush1.msra.mxu0 0.0
        %1041 = vmatprep.subr.mxu0 0.0
        %1042 = vmatpush1.msra.mxu0 0.0
        %1043 = vmatprep.subr.mxu0 0.0
        %1044 = vmatpush1.msra.mxu0 0.0
        %1045 = vmatprep.subr.mxu0 0.0
        %1046 = vmatpush1.msra.mxu0 0.0
        %1047 = vmatprep.subr.mxu0 0.0
        %1048 = vmatpush1.msra.mxu0 0.0
        %1049 = vmatprep.subr.mxu0 0.0
        %1050 = vmatpush1.msra.mxu0 0.0
        %1051 = vmatprep.subr.mxu0 0.0
        %1052 = vmatpush1.msra.mxu0 0.0
        %1053 = vmatprep.subr.mxu0 0.0
        %1054 = vmatpush1.msra.mxu0 0.0
        %1055 = vmatprep.mubr.f32.mxu0 %v986
        %1056 = vmatmul.mubr.f32.gmra.mrb[0].mxu0 %v932
        %v1057 = vpop.f32.mrb[0].mxu0
        %v1058 = vadd.f32 %v977, %v1057
        %v1059 = vpop.f32.mrb[0].mxu0
        %v1060 = vadd.f32 %v977, %v1059
        %1061 = vmatprep.mubr.f32.mxu0 %v989
        %1062 = vmatmul.mubr.f32.gmra.mrb[0].mxu0 %v934
        %v1063 = vpop.f32.mrb[0].mxu0
        %v1064 = vadd.f32 %v982, %v1063
        %v1065 = vpop.f32.mrb[0].mxu0
        %v1066 = vadd.f32 %v982, %v1065
        %1067 = vdwg.mxu0
        %vm1068 = vcmp.gt.f32.partialorder %v1058, 0.0
        %vm1069 = vcmp.gt.f32.partialorder %v1060, 0.0
        %vm1070 = vcmp.gt.f32.partialorder %v1064, 0.0
        %vm1071 = vcmp.gt.f32.partialorder %v1066, 0.0
        %v1072 = vmul.f32 %v1058, 0.3
        %v1073 = vmul.f32 %v1060, 0.3
        %v1074 = vmul.f32 %v1064, 0.3
        %v1075 = vmul.f32 %v1066, 0.3
        %v1076 = vsel %vm1068, %v1058, %v1072
        %v1077 = vsel %vm1069, %v1060, %v1073
        %v1078 = vsel %vm1070, %v1064, %v1074
        %v1079 = vsel %vm1071, %v1066, %v1075
        %v1080 = vld [vmem:[%s6] sm:$0xff]
        %v1081 = vld [vmem:[%s6 + $0x8] sm:$0xff]
        %v1082 = vld [vmem:[%s7] sm:$0xff]
        %v1083 = vld [vmem:[%s7 + $0x8] sm:$0xff]
        %1085 = vset.pattern.permute.xlu0 0
        %1086 = vperm.xlu0 %1085, %v1082
        %v1087 = vpop.permute.xlu0 %1086
        %1090 = vset.pattern.permute.xlu0 0
        %1091 = vperm.xlu0 %1090, %v1083
        %v1092 = vpop.permute.xlu0 %1091
        %v1095 = vsel %vm984, %v1080, 0
        %v1098 = vsel %vm984, %v1081, 0
        %1100 = vmatprep.subr.mxu0 %v1077
        %1101 = vmatpush1.msra.mxu0 %v1076
        %1102 = vmatprep.subr.mxu0 %v1079
        %1103 = vmatpush1.msra.mxu0 %v1078
        %1104 = vmatprep.subr.mxu0 0.0
        %1105 = vmatpush1.msra.mxu0 0.0
        %1106 = vmatprep.subr.mxu0 0.0
        %1107 = vmatpush1.msra.mxu0 0.0
        %1108 = vmatprep.subr.mxu0 0.0
        %1109 = vmatpush1.msra.mxu0 0.0
        %1110 = vmatprep.subr.mxu0 0.0
        %1111 = vmatpush1.msra.mxu0 0.0
        %1112 = vmatprep.subr.mxu0 0.0
        %1113 = vmatpush1.msra.mxu0 0.0
        %1114 = vmatprep.subr.mxu0 0.0
        %1115 = vmatpush1.msra.mxu0 0.0
        %1116 = vmatprep.subr.mxu0 0.0
        %1117 = vmatpush1.msra.mxu0 0.0
        %1118 = vmatprep.subr.mxu0 0.0
        %1119 = vmatpush1.msra.mxu0 0.0
        %1120 = vmatprep.subr.mxu0 0.0
        %1121 = vmatpush1.msra.mxu0 0.0
        %1122 = vmatprep.subr.mxu0 0.0
        %1123 = vmatpush1.msra.mxu0 0.0
        %1124 = vmatprep.subr.mxu0 0.0
        %1125 = vmatpush1.msra.mxu0 0.0
        %1126 = vmatprep.subr.mxu0 0.0
        %1127 = vmatpush1.msra.mxu0 0.0
        %1128 = vmatprep.subr.mxu0 0.0
        %1129 = vmatpush1.msra.mxu0 0.0
        %1130 = vmatprep.subr.mxu0 0.0
        %1131 = vmatpush1.msra.mxu0 0.0
        %1132 = vmatprep.subr.mxu0 0.0
        %1133 = vmatpush1.msra.mxu0 0.0
        %1134 = vmatprep.subr.mxu0 0.0
        %1135 = vmatpush1.msra.mxu0 0.0
        %1136 = vmatprep.subr.mxu0 0.0
        %1137 = vmatpush1.msra.mxu0 0.0
        %1138 = vmatprep.subr.mxu0 0.0
        %1139 = vmatpush1.msra.mxu0 0.0
        %1140 = vmatprep.subr.mxu0 0.0
        %1141 = vmatpush1.msra.mxu0 0.0
        %1142 = vmatprep.subr.mxu0 0.0
        %1143 = vmatpush1.msra.mxu0 0.0
        %1144 = vmatprep.subr.mxu0 0.0
        %1145 = vmatpush1.msra.mxu0 0.0
        %1146 = vmatprep.subr.mxu0 0.0
        %1147 = vmatpush1.msra.mxu0 0.0
        %1148 = vmatprep.subr.mxu0 0.0
        %1149 = vmatpush1.msra.mxu0 0.0
        %1150 = vmatprep.subr.mxu0 0.0
        %1151 = vmatpush1.msra.mxu0 0.0
        %1152 = vmatprep.subr.mxu0 0.0
        %1153 = vmatpush1.msra.mxu0 0.0
        %1154 = vmatprep.subr.mxu0 0.0
        %1155 = vmatpush1.msra.mxu0 0.0
        %1156 = vmatprep.subr.mxu0 0.0
        %1157 = vmatpush1.msra.mxu0 0.0
        %1158 = vmatprep.subr.mxu0 0.0
        %1159 = vmatpush1.msra.mxu0 0.0
        %1160 = vmatprep.subr.mxu0 0.0
        %1161 = vmatpush1.msra.mxu0 0.0
        %1162 = vmatprep.subr.mxu0 0.0
        %1163 = vmatpush1.msra.mxu0 0.0
        %1164 = vmatprep.mubr.f32.mxu0 0.0
        %1165 = vmatmul.mubr.f32.gmra.mrb[0].mxu0 %v1095
        %v1166 = vpop.f32.mrb[0].mxu0
        %v1167 = vadd.f32 %v1087, %v1166
        %v1168 = vpop.f32.mrb[0].mxu0
        %v1169 = vadd.f32 %v1087, %v1168
        %1170 = vmatprep.mubr.f32.mxu0 0.0
        %1171 = vmatmul.mubr.f32.gmra.mrb[0].mxu0 %v1098
        %v1172 = vpop.f32.mrb[0].mxu0
        %v1173 = vadd.f32 %v1092, %v1172
        %v1174 = vpop.f32.mrb[0].mxu0
        %v1175 = vadd.f32 %v1092, %v1174
        %1176 = vdwg.mxu0
        %vm1177 = vcmp.gt.f32.partialorder %v1167, 0.0
        %vm1178 = vcmp.gt.f32.partialorder %v1169, 0.0
        %vm1179 = vcmp.gt.f32.partialorder %v1173, 0.0
        %vm1180 = vcmp.gt.f32.partialorder %v1175, 0.0
        %v1181 = vmul.f32 %v1167, 0.3
        %v1182 = vmul.f32 %v1169, 0.3
        %v1183 = vmul.f32 %v1173, 0.3
        %v1184 = vmul.f32 %v1175, 0.3
        %v1185 = vsel %vm1177, %v1167, %v1181
        %v1186 = vsel %vm1178, %v1169, %v1182
        %v1187 = vsel %vm1179, %v1173, %v1183
        %v1188 = vsel %vm1180, %v1175, %v1184
        %v1189 = vld [vmem:[%s8] sm:$0xf]
        %v1191 = vsel %vm984, %v1189, 0
        %1193 = vmatprep.subr.mxu0 %v1186
        %1194 = vmatpush1.msra.mxu0 %v1185
        %1195 = vmatprep.subr.mxu0 %v1188
        %1196 = vmatpush1.msra.mxu0 %v1187
        %1197 = vmatprep.subr.mxu0 0.0
        %1198 = vmatpush1.msra.mxu0 0.0
        %1199 = vmatprep.subr.mxu0 0.0
        %1200 = vmatpush1.msra.mxu0 0.0
        %1201 = vmatprep.subr.mxu0 0.0
        %1202 = vmatpush1.msra.mxu0 0.0
        %1203 = vmatprep.subr.mxu0 0.0
        %1204 = vmatpush1.msra.mxu0 0.0
        %1205 = vmatprep.subr.mxu0 0.0
        %1206 = vmatpush1.msra.mxu0 0.0
        %1207 = vmatprep.subr.mxu0 0.0
        %1208 = vmatpush1.msra.mxu0 0.0
        %1209 = vmatprep.subr.mxu0 0.0
        %1210 = vmatpush1.msra.mxu0 0.0
        %1211 = vmatprep.subr.mxu0 0.0
        %1212 = vmatpush1.msra.mxu0 0.0
        %1213 = vmatprep.subr.mxu0 0.0
        %1214 = vmatpush1.msra.mxu0 0.0
        %1215 = vmatprep.subr.mxu0 0.0
        %1216 = vmatpush1.msra.mxu0 0.0
        %1217 = vmatprep.subr.mxu0 0.0
        %1218 = vmatpush1.msra.mxu0 0.0
        %1219 = vmatprep.subr.mxu0 0.0
        %1220 = vmatpush1.msra.mxu0 0.0
        %1221 = vmatprep.subr.mxu0 0.0
        %1222 = vmatpush1.msra.mxu0 0.0
        %1223 = vmatprep.subr.mxu0 0.0
        %1224 = vmatpush1.msra.mxu0 0.0
        %1225 = vmatprep.subr.mxu0 0.0
        %1226 = vmatpush1.msra.mxu0 0.0
        %1227 = vmatprep.subr.mxu0 0.0
        %1228 = vmatpush1.msra.mxu0 0.0
        %1229 = vmatprep.subr.mxu0 0.0
        %1230 = vmatpush1.msra.mxu0 0.0
        %1231 = vmatprep.subr.mxu0 0.0
        %1232 = vmatpush1.msra.mxu0 0.0
        %1233 = vmatprep.subr.mxu0 0.0
        %1234 = vmatpush1.msra.mxu0 0.0
        %1235 = vmatprep.subr.mxu0 0.0
        %1236 = vmatpush1.msra.mxu0 0.0
        %1237 = vmatprep.subr.mxu0 0.0
        %1238 = vmatpush1.msra.mxu0 0.0
        %1239 = vmatprep.subr.mxu0 0.0
        %1240 = vmatpush1.msra.mxu0 0.0
        %1241 = vmatprep.subr.mxu0 0.0
        %1242 = vmatpush1.msra.mxu0 0.0
        %1243 = vmatprep.subr.mxu0 0.0
        %1244 = vmatpush1.msra.mxu0 0.0
        %1245 = vmatprep.subr.mxu0 0.0
        %1246 = vmatpush1.msra.mxu0 0.0
        %1247 = vmatprep.subr.mxu0 0.0
        %1248 = vmatpush1.msra.mxu0 0.0
        %1249 = vmatprep.subr.mxu0 0.0
        %1250 = vmatpush1.msra.mxu0 0.0
        %1251 = vmatprep.subr.mxu0 0.0
        %1252 = vmatpush1.msra.mxu0 0.0
        %1253 = vmatprep.subr.mxu0 0.0
        %1254 = vmatpush1.msra.mxu0 0.0
        %1255 = vmatprep.subr.mxu0 0.0
        %1256 = vmatpush1.msra.mxu0 0.0
        %1257 = vmatprep.mubr.f32.mxu0 0.0
        %1258 = vmatmul.mubr.f32.gmra.mrb[0].mxu0 %v1191
        %v1259 = vpop.f32.mrb[0].mxu0
        %v1260 = vadd.f32 0.0, %v1259
        %v1261 = vpop.f32.mrb[0].mxu0
        %v1262 = vadd.f32 0.0, %v1261
        %1263 = vdwg.mxu0
        %vm1264 = vcmask 1043456
        %v1265 = vsel %vm1264, %v1260, 0.0
        %v1266 = vsel %vm1264, %v1262, 0.0
        %v1267 = vadd.f32 %v1265, %v1266
        %1268 = vadd.xlane.f32.xlu0 %v1267
        %v1269 = vpop.xlane.xlu0 %1268
        %v1270 = vmul.f32 %v1269, 0.00390625
        %v1271 = vld [vmem:[%s9] sm:$0xf]
        %v1272 = vadd.f32 %v1270, %v1271
        %vm1273 = vcmp.gt.f32.partialorder %v1272, 0.0
        %v1274 = vmul.f32 %v1272, 0.2
        %v1275 = vsel %vm1273, %v1272, %v1274
        %v1276 = vld [vmem:[%s11] sm:$0xff]
        %v1277 = vld [vmem:[%s11 + $0x8] sm:$0xff]
        %v1278 = vld [vmem:[%s10] sm:$0xff]
        %v1279 = vld [vmem:[%s10 + $0x8] sm:$0xff]
        %v1280 = vlaneseq
        %v1281 = vshrl.u32 %v1280, 7
        %v1282 = vsub.s32 0, %v1281
        %v1283 = vrot.slane %v1275, %v1282
        %v1284 = vmul.f32 %v1278, %v1283
        %v1285 = vmul.f32 %v1279, %v1283
        %v1286 = vadd.f32 %v1276, %v1284
        %v1287 = vadd.f32 %v1277, %v1285
        %v1288 = vlaneseq
        %v1289 = vshrl.u32 %v1288, 7
        %v1290 = vsub.s32 1, %v1289
        %v1291 = vrot.slane %v1275, %v1290
        %1293 = vrot.lane.b32.xlu0 %v1291, 1
        %v1294 = vpop.permute.xlu0 %1293
        %v1296 = vmul.f32 %v1278, %v1294
        %v1297 = vmul.f32 %v1279, %v1294
        %1300 = vrot.lane.b32.xlu0 %v1296, 127
        %v1301 = vpop.permute.xlu0 %1300
        %1302 = vrot.lane.b32.xlu0 %v1297, 127
        %v1303 = vpop.permute.xlu0 %1302
        %v1306 = vadd.f32 %v1286, %v1301
        %v1307 = vadd.f32 %v1287, %v1303
        %v1308 = vlaneseq
        %v1309 = vshrl.u32 %v1308, 7
        %v1310 = vsub.s32 2, %v1309
        %v1311 = vrot.slane %v1275, %v1310
        %1313 = vrot.lane.b32.xlu0 %v1311, 2
        %v1314 = vpop.permute.xlu0 %1313
        %v1316 = vmul.f32 %v1278, %v1314
        %v1317 = vmul.f32 %v1279, %v1314
        %1320 = vrot.lane.b32.xlu0 %v1316, 126
        %v1321 = vpop.permute.xlu0 %1320
        %1322 = vrot.lane.b32.xlu0 %v1317, 126
        %v1323 = vpop.permute.xlu0 %1322
        %v1326 = vadd.f32 %v1306, %v1321
        %v1327 = vadd.f32 %v1307, %v1323
        %v1328 = vlaneseq
        %v1329 = vshrl.u32 %v1328, 7
        %v1330 = vsub.s32 3, %v1329
        %v1331 = vrot.slane %v1275, %v1330
        %1333 = vrot.lane.b32.xlu0 %v1331, 3
        %v1334 = vpop.permute.xlu0 %1333
        %v1336 = vmul.f32 %v1278, %v1334
        %v1337 = vmul.f32 %v1279, %v1334
        %1340 = vrot.lane.b32.xlu0 %v1336, 125
        %v1341 = vpop.permute.xlu0 %1340
        %1342 = vrot.lane.b32.xlu0 %v1337, 125
        %v1343 = vpop.permute.xlu0 %1342
        %v1346 = vadd.f32 %v1326, %v1341
        %v1347 = vadd.f32 %v1327, %v1343
        %v1348 = vtanh.pop %v1346
        %v1349 = vtanh.pop %v1347
        %1351 = vset.pattern.permute.xlu0 0
        %1352 = vperm.xlu0 %1351, %v1348
        %v1353 = vpop.permute.xlu0 %1352
        %1356 = vset.pattern.permute.xlu0 0
        %1357 = vperm.xlu0 %1356, %v1349
        %v1358 = vpop.permute.xlu0 %1357
        %v1360 = vmul.f32 %v1185, %v1353
        %v1361 = vmul.f32 %v1186, %v1353
        %v1362 = vmul.f32 %v1187, %v1358
        %v1363 = vmul.f32 %v1188, %v1358
        %v1364 = vld [vmem:[%s426] sm:$0xff]
        %v1365 = vld [vmem:[%s426 + $0x8] sm:$0xff]
        %v1366 = vld [vmem:[%s426 + $0x10] sm:$0xff]
        %v1367 = vld [vmem:[%s426 + $0x18] sm:$0xff]
        %v1368 = vadd.f32 %v1360, %v1364
        %v1369 = vadd.f32 %v1361, %v1365
        %v1370 = vadd.f32 %v1362, %v1366
        %v1371 = vadd.f32 %v1363, %v1367
        %1372 = vst [vmem:[%s421] sm:$0xff] %v1368
        %1373 = vst [vmem:[%s421 + $0x8] sm:$0xff] %v1369
        %1374 = vst [vmem:[%s421 + $0x10] sm:$0xff] %v1370
        %1375 = vst [vmem:[%s421 + $0x18] sm:$0xff] %v1371
        %s1376 = sand.u32 %s292, 1
        %s1377 = scalar_lea.sflag [#allocation6], %s1376
        %s1378 = sand.u32 %s292, 1
        %s1379 = smul.addr %s1378, 32
        %s1380 = scalar_lea.vmem [#allocation7], %s1379
        // Predicated region
        $region73: #{tpu_custom_call.1} parent=67 // pred_check
          %p1381 = pneg %p302
        $region74: #{tpu_custom_call.1} parent=67 // pred_check_branch
          %1383 = sbr.rel (%p1381) target = $region76
        $region75: #{tpu_custom_call.1} parent=67 // pred_region
          %s1385 = ssub.s32 512, 512
          %1386 = vsyncadd %s1377, %s1385
          %s1387 = smul.addr %s27, 4
          %s1388 = smul.addr %s1387, 128
          %s1389 = scalar_lea.hbm %s12, %s1388
          %s1390 = sshll.u32 %s1380, 4
          %s1391 = int_to_ptr.vmem [resolvable:$true] %s1390
          %1396 = dma.vmem_to_hbm [thread:$0]  %s1391, 512, %s1389, %s1377, 256, 256, 16
        $region76: #{tpu_custom_call.1} parent=67 // pred_fallthru
          _
      $region68: #{tpu_custom_call.1} parent=5 // pred_fallthru
        _
      %p1397 = scmp.le.s32.totalorder 2, %s22
      // Predicated region
      $region77: #{tpu_custom_call.1} parent=5 // pred_check
        %p1398 = pneg %p1397
      $region78: #{tpu_custom_call.1} parent=5 // pred_check_branch
        %1400 = sbr.rel (%p1398) target = $region80
      $region79: #{tpu_custom_call.1} parent=5 // pred_region
        %s1401 = ssub.s32 %s22, 2
        // Predicated region
        $region81: #{tpu_custom_call.1} parent=79 // pred_check
          %p1402 = pneg %p308
        $region82: #{tpu_custom_call.1} parent=79 // pred_check_branch
          %1404 = sbr.rel (%p1402) target = $region84
        $region83: #{tpu_custom_call.1} parent=79 // pred_region
          %s1405 = sand.u32 %s293, 1
          %s1406 = scalar_lea.sflag [#allocation6], %s1405
          %s1407 = sand.u32 %s293, 1
          %s1408 = smul.addr %s1407, 32
          %s1409 = scalar_lea.vmem [#allocation7], %s1408
          %1410 = dma.done %s1406, 512
        $region84: #{tpu_custom_call.1} parent=79 // pred_fallthru
          _
      $region80: #{tpu_custom_call.1} parent=5 // pred_fallthru
        _
    $region6: #{tpu_custom_call.1} parent=1 // loop_footer
      %s26 = sadd.s32 1, %s22
    $region7: #{tpu_custom_call.1} parent=1 // loop_footer_branch
      %21 = sbr.rel target = $region3
    $region8: #{tpu_custom_call.1} parent=1 // loop_exit
      _
    %1411 = vsyncpa [#allocation5], 1
    %s1412 = scalar_lea.sflag [#allocation5], 1
    %1413 = vsyncpa %s1412, 1
    %1414 = vsyncpa [#allocation6], 1
    %s1415 = scalar_lea.sflag [#allocation6], 1
    %1416 = vsyncpa %s1415, 1

</llo_original>
